<compile_context>
chip_gen: v7x
topology: tpu7x:2x2x1
jax: 0.10.0
libtpu: 0.0.40
codegen_flags: <defaults>
</compile_context>

<pallas_src>
import functools

import jax
import jax.numpy as jnp
import numpy as np
from jax import lax
from jax.experimental import pallas as pl
from jax.experimental.pallas import tpu as pltpu


_NP = 10                    # per-image scalar params packed into flat SMEM array
_SALT_SRC = 0x5BD1E995      # hash salt for the sources' noise draw
_SALT_TGT = 0x27D4EB2F      # hash salt for the targets' noise draw (independent)
_SALT_STEP = 0x3C6EF35F     # per-uniform-word salt increment


def _i32(v):
    """Python int -> wrapped int32 constant (two's complement)."""
    v &= 0xFFFFFFFF
    if v >= 0x80000000:
        v -= 0x100000000
    return jnp.int32(v)


def _mix32(x):
    """murmur3 fmix32 finalizer on int32 data.

    Logical right shifts are emulated with arithmetic shift + mask so that
    everything stays in plain int32 VPU ops (safe on Mosaic and in interpret).
    """
    x = x ^ ((x >> 16) & 0xFFFF)
    x = x * _i32(0x85EBCA6B)
    x = x ^ ((x >> 13) & 0x7FFFF)
    x = x * _i32(0xC2B2AE35)
    x = x ^ ((x >> 16) & 0xFFFF)
    return x


def _approx_normal(elem, salt):
    """~N(0,1) noise from a counter-based hash (pure int/f32 VPU ops).

    Sum of six 16-bit uniforms (Irwin–Hall), rescaled to exact unit variance.
    TODO(synk): an exact torch.randn-equivalent Gaussian would need the
    on-chip PRNG (pltpu.prng_seed/stateful_normal), which cannot be lowered in
    the CPU-interpret harness; Irwin–Hall(6) is used as a portable
    approximation (exact mean 0 / std 1, support ±4.24 sigma).
    """
    total = None
    for j in range(3):
        h = _mix32(elem + _i32(salt + j * _SALT_STEP))
        lo = (h & 0xFFFF).astype(jnp.float32)
        hi = ((h >> 16) & 0xFFFF).astype(jnp.float32)
        u = (lo + hi) * jnp.float32(1.0 / 65536.0)   # sum of two U(0,1)
        total = u if total is None else total + u
    return (total - 3.0) * jnp.float32(np.sqrt(2.0))


# ----------------------------------------------------------------------------
# Pallas kernel: per-pixel augmentation on one (C, TS, 128) tile of one image.
# ----------------------------------------------------------------------------
def _ada_aug_kernel(params_ref, seed_ref, s_ref, t_ref, os_ref, ot_ref,
                    *, H, W, L_pad, TS):
    b = pl.program_id(0)
    tile = pl.program_id(1)
    C = s_ref.shape[0]

    base = b * _NP
    br_off = params_ref[base + 0]   # brightness_random - 0.5
    cmul   = params_ref[base + 1]   # contrast_random + 0.5   (1.0 when disabled)
    smul   = params_ref[base + 2]   # saturation_random * 2   (1.0 when disabled)
    sig    = params_ref[base + 3]   # gated noise sigma (|N(0,1)| * noise_std or 0)
    cx     = params_ref[base + 4]   # cutout center x in [0,1)
    cy     = params_ref[base + 5]   # cutout center y in [0,1)
    hszx   = params_ref[base + 6]   # gated cutout half-size x
    hszy   = params_ref[base + 7]   # gated cutout half-size y
    smean  = params_ref[base + 8]   # per-image mean(sources), hoisted to glue
    tmean  = params_ref[base + 9]   # per-image mean(targets), hoisted to glue
    sd     = seed_ref[b]            # per-image PRNG salt

    inv_w = jnp.float32(1.0 / W)
    inv_h = jnp.float32(1.0 / H)

    # ---- flat spatial index of this tile; recover (x, y) without int div ---
    rows = lax.broadcasted_iota(jnp.int32, (TS, 128), 0)
    lanes = lax.broadcasted_iota(jnp.int32, (TS, 128), 1)
    p_i = tile * (TS * 128) + rows * 128 + lanes          # (TS,128) int32
    p_f = p_i.astype(jnp.float32)
    if L_pad < (1 << 22):
        # float reciprocal + truncation is exact for H*W < 2^22 (no VPU int div)
        y_f = ((p_f + 0.5) * inv_w).astype(jnp.int32).astype(jnp.float32)
    else:
        y_f = (p_i // W).astype(jnp.float32)
    x_f = p_f - y_f * jnp.float32(W)

    # ---- cutout mask (shared by sources / targets) --------------------------
    mask_x = jnp.abs((x_f + 0.5) * inv_w - cx) >= hszx
    mask_y = jnp.abs((y_f + 0.5) * inv_h - cy) >= hszy
    mask = jnp.logical_or(mask_x, mask_y).astype(jnp.float32)   # (TS,128)

    # Unique per-element counter for the hash PRNG (independent of tiling).
    chan = lax.broadcasted_iota(jnp.int32, (C, TS, 128), 0)
    elem = p_i + chan * _i32(L_pad) + sd                        # (C,TS,128)

    def photometric(x, img_mean):
        # brightness: x + (rand - 0.5)
        x = x + br_off
        # contrast: per-image mean hoisted to glue (mean(x + c) == mean(x) + c)
        m = img_mean + br_off
        x = (x - m) * cmul + m
        # saturation: per-pixel channel mean; C is a leading dim -> plain VPU adds
        cm = jnp.mean(x, axis=0, keepdims=True)
        return (x - cm) * smul + cm

    def add_gated_noise(out_ref, salt):
        # Per-image gate: skip Gaussian generation entirely when sigma == 0.
        @pl.when(sig > 0.0)
        def _():
            z = _approx_normal(elem, salt)
            out_ref[...] = (out_ref[...].astype(jnp.float32)
                            + (z * sig) * mask).astype(out_ref.dtype)

    # Sources fully first, then targets (halves peak live f32 temporaries).
    s = photometric(s_ref[...].astype(jnp.float32), smean)
    os_ref[...] = (s * mask).astype(os_ref.dtype)
    add_gated_noise(os_ref, _SALT_SRC)

    t = photometric(t_ref[...].astype(jnp.float32), tmean)
    ot_ref[...] = (t * mask).astype(ot_ref.dtype)
    add_gated_noise(ot_ref, _SALT_TGT)


# ----------------------------------------------------------------------------
# Wrapper: lane-dense padded layout, BlockSpecs, VMEM budget.
# ----------------------------------------------------------------------------
def _round_up(x, m):
    return (x + m - 1) // m * m


def _pick_ts_max():
    """Rows per tile: smaller on v7x (64 MiB VMEM/TC), 256 elsewhere."""
    try:
        info = pltpu.get_tpu_info()
        vmem = int(getattr(info, "vmem_capacity_bytes", 128 << 20))
        return 128 if vmem <= (64 << 20) else 256
    except Exception:
        return 256


def ada_augment_pallas(sources, targets, params, seeds):
    """sources/targets: (B,C,H,W); params: (B*_NP,) f32; seeds: (B,) i32."""
    B, C, H, W = sources.shape
    L = H * W

    # Lane-dense layout: flatten spatial dims, pad to a multiple of 8*128 and
    # view as (B, C, rows, 128) so the channel axis is NOT the sublane axis.
    rows = _round_up(pl.cdiv(L, 128), 8)
    TS = min(_pick_ts_max(), rows)            # rows per tile (multiple of 8)
    rows_pad = _round_up(rows, TS)
    L_pad = rows_pad * 128
    n_tiles = rows_pad // TS

    def to4d(x):
        xf = x.reshape(B, C, L)
        if L_pad != L:
            xf = jnp.pad(xf, ((0, 0), (0, 0), (0, L_pad - L)))
        return xf.reshape(B, C, rows_pad, 128)

    src4 = to4d(sources)
    tgt4 = to4d(targets)

    img_spec = pl.BlockSpec((None, C, TS, 128), lambda b, t: (b, 0, t, 0))

    itemsize = jnp.dtype(sources.dtype).itemsize
    blk_io = C * TS * 128 * itemsize
    blk_f32 = C * TS * 128 * 4
    # 4 I/O arrays double-buffered + ~10 block-sized f32 temporaries + headroom,
    # clamped to <= 48 MiB (v7x has 64 MiB VMEM per TensorCore).
    vmem_limit = int(min(max(8 * blk_io + 10 * blk_f32 + (4 << 20), 16 << 20),
                         48 << 20))

    kernel = functools.partial(_ada_aug_kernel, H=H, W=W, L_pad=L_pad, TS=TS)

    out_s4, out_t4 = pl.pallas_call(
        kernel,
        out_shape=(jax.ShapeDtypeStruct((B, C, rows_pad, 128), sources.dtype),
                   jax.ShapeDtypeStruct((B, C, rows_pad, 128), targets.dtype)),
        grid=(B, n_tiles),
        in_specs=[pl.BlockSpec(memory_space=pltpu.SMEM),   # params (B*_NP,) f32
                  pl.BlockSpec(memory_space=pltpu.SMEM),   # seeds  (B,)     i32
                  img_spec, img_spec],
        out_specs=(img_spec, img_spec),
        compiler_params=pltpu.CompilerParams(
            dimension_semantics=("parallel", "parallel"),
            vmem_limit_bytes=vmem_limit),
    )(params, seeds, src4, tgt4)

    def from4d(x4):
        xf = x4.reshape(B, C, L_pad)
        if L_pad != L:
            xf = xf[:, :, :L]
        return xf.reshape(B, C, H, W)

    return from4d(out_s4), from4d(out_t4)


# ----------------------------------------------------------------------------
# Module wrapper: draws per-image randomness / folds scalars (glue, plain JAX)
# and calls the Pallas kernel.
# ----------------------------------------------------------------------------
class AdaAugmentPallas:
    def __init__(self, brightness=0.0, contrast=0.0, saturation=0.0,
                 noise=0.0, cutout=0.0, noise_std=0.1, cutout_size=0.5, p=1.0):
        # geometric strengths (xflip, rotate90, xint, scale, rotate, aniso,
        # xfrac) are fixed at their default of 0 -> geometric branch skipped.
        self.brightness = float(brightness)
        self.contrast = float(contrast)
        self.saturation = float(saturation)
        self.noise = float(noise)
        self.cutout = float(cutout)
        self.noise_std = float(noise_std)
        self.cutout_size = float(cutout_size)
        self.p = float(p)

    def draw_params(self, key, sources, targets):
        B, C, H, W = sources.shape
        ks = jax.random.split(key, 8)

        # identity-preserving values when an op's strength is 0
        if self.brightness > 0:
            br_off = jax.random.uniform(ks[0], (B,)) - 0.5
        else:
            br_off = jnp.zeros((B,), jnp.float32)
        if self.contrast > 0:
            cmul = jax.random.uniform(ks[1], (B,)) + 0.5
        else:
            cmul = jnp.ones((B,), jnp.float32)
        if self.saturation > 0 and C > 1:
            smul = jax.random.uniform(ks[2], (B,)) * 2.0
        else:
            smul = jnp.ones((B,), jnp.float32)
        if self.noise > 0:
            sigma = jnp.abs(jax.random.normal(ks[3], (B,))) * self.noise_std
            sigma = jnp.where(
                jax.random.uniform(ks[4], (B,)) < self.noise * self.p, sigma, 0.0)
        else:
            sigma = jnp.zeros((B,), jnp.float32)
        if self.cutout > 0:
            half = jnp.full((B,), self.cutout_size * 0.5, jnp.float32)
            gate = jax.random.uniform(ks[5], (B,)) < self.cutout * self.p
            hszx = jnp.where(gate, half, 0.0)
            hszy = hszx
            center = jax.random.uniform(ks[6], (B, 2))
            cx, cy = center[:, 0], center[:, 1]
        else:
            hszx = jnp.zeros((B,), jnp.float32)
            hszy = hszx
            cx = jnp.zeros((B,), jnp.float32)
            cy = cx

        # hoisted per-image contrast means, always in float32
        smean = jnp.mean(sources.astype(jnp.float32), axis=(1, 2, 3))
        tmean = jnp.mean(targets.astype(jnp.float32), axis=(1, 2, 3))

        params = jnp.stack(
            [br_off, cmul, smul, sigma, cx, cy, hszx, hszy, smean, tmean],
            axis=1).astype(jnp.float32).reshape(-1)          # (B*_NP,) tiny SMEM
        seeds = jax.random.randint(ks[7], (B,), 0, jnp.iinfo(jnp.int32).max,
                                   dtype=jnp.int32)
        return params, seeds

    def __call__(self, key, sources, targets):
        assert sources.ndim == 4 and sources.shape == targets.shape
        params, seeds = self.draw_params(key, sources, targets)
        return ada_augment_pallas(sources, targets, params, seeds)


# ----------------------------------------------------------------------------
# Pure-JAX reference for the deterministic path (no noise), mirroring the
# PyTorch forward for the enabled branches.
# ----------------------------------------------------------------------------
def _reference_no_noise(sources, targets, params):
    B, C, H, W = sources.shape
    p = params.reshape(B, _NP)
    br_off = p[:, 0].reshape(B, 1, 1, 1)
    cmul = p[:, 1].reshape(B, 1, 1, 1)
    smul = p[:, 2].reshape(B, 1, 1, 1)
    cx = p[:, 4].reshape(B, 1, 1, 1)
    cy = p[:, 5].reshape(B, 1, 1, 1)
    hszx = p[:, 6].reshape(B, 1, 1, 1)
    hszy = p[:, 7].reshape(B, 1, 1, 1)

    s = sources.astype(jnp.float32) + br_off
    t = targets.astype(jnp.float32) + br_off
    sm = s.mean(axis=(1, 2, 3), keepdims=True)
    tm = t.mean(axis=(1, 2, 3), keepdims=True)
    s = (s - sm) * cmul + sm
    t = (t - tm) * cmul + tm
    smc = s.mean(axis=1, keepdims=True)
    tmc = t.mean(axis=1, keepdims=True)
    s = (s - smc) * smul + smc
    t = (t - tmc) * smul + tmc
    coord_x = jnp.arange(W, dtype=jnp.float32).reshape(1, 1, 1, W)
    coord_y = jnp.arange(H, dtype=jnp.float32).reshape(1, 1, H, 1)
    mask_x = jnp.abs((coord_x + 0.5) / W - cx) >= hszx
    mask_y = jnp.abs((coord_y + 0.5) / H - cy) >= hszy
    mask = jnp.logical_or(mask_x, mask_y).astype(jnp.float32)
    return s * mask, t * mask, mask


if __name__ == "__main__":
    key = jax.random.PRNGKey(0)
    B, C, H, W = 2, 4, 16, 16
    k_src, k_tgt, k_aug = jax.random.split(key, 3)
    sources = jax.random.normal(k_src, (B, C, H, W), jnp.float32)
    targets = jax.random.normal(k_tgt, (B, C, H, W), jnp.float32)

    aug = AdaAugmentPallas(brightness=1.0, contrast=1.0, saturation=1.0,
                           noise=1.0, cutout=1.0, noise_std=0.1, cutout_size=0.5)

    params, seeds = aug.draw_params(k_aug, sources, targets)

    # 1) deterministic path (sigma forced to 0) must match the pure-JAX ref.
    params0 = params.at[3::_NP].set(0.0)
    out_s0, out_t0 = ada_augment_pallas(sources, targets, params0, seeds)
    jax.block_until_ready((out_s0, out_t0))
    ref_s, ref_t, mask = _reference_no_noise(sources, targets, params)
    np.testing.assert_allclose(np.asarray(out_s0), np.asarray(ref_s),
                               rtol=1e-5, atol=1e-5)
    np.testing.assert_allclose(np.asarray(out_t0), np.asarray(ref_t),
                               rtol=1e-5, atol=1e-5)

    # 2) noisy path: noise is generated in-kernel, check it statistically
    #    (residual inside the kept region should have std ~= sigma).
    out_s, out_t = ada_augment_pallas(sources, targets, params, seeds)
    jax.block_until_ready((out_s, out_t))
    sig = np.asarray(params.reshape(B, _NP)[:, 3])
    m = np.asarray(mask)
    for name, out, ref in (("src", out_s, ref_s), ("tgt", out_t, ref_t)):
        res = np.asarray(out) - np.asarray(ref)
        for b in range(B):
            kept = np.broadcast_to(m[b], res[b].shape) > 0
            r = res[b][kept]
            if sig[b] > 5e-3:
                assert abs(float(r.std()) / float(sig[b]) - 1.0) < 0.35, \
                    (name, b, float(r.std()), float(sig[b]))
            else:
                assert float(np.max(np.abs(r))) <= 6.0 * float(sig[b]) + 1e-4, \
                    (name, b, float(np.max(np.abs(r))), float(sig[b]))

    print("KERNEL_OK")
</pallas_src>

<mosaic_0001>
module attributes {stable_mosaic.version = 11 : i64} {
  func.func @_ada_aug_kernel(%arg0: i32, %arg1: i32, %arg2: memref<20xf32, #tpu.memory_space<smem>>, %arg3: memref<2xi32, #tpu.memory_space<smem>>, %arg4: memref<1x4x8x128xf32, #tpu.memory_space<vmem>>, %arg5: memref<1x4x8x128xf32, #tpu.memory_space<vmem>>, %arg6: memref<1x4x8x128xf32, #tpu.memory_space<vmem>>, %arg7: memref<1x4x8x128xf32, #tpu.memory_space<vmem>>) attributes {dimension_semantics = [#tpu.dimension_semantics<parallel>, #tpu.dimension_semantics<parallel>], iteration_bounds = array<i64: 2, 1>, scalar_prefetch = 0 : i64, scratch_operands = 0 : i64, tpu.core_type = #tpu.core_type<tc>, window_params = [{transform_indices = @transform_0, window_bounds = array<i64: 20>}, {transform_indices = @transform_1, window_bounds = array<i64: 2>}, {transform_indices = @transform_2, window_bounds = array<i64: 1, 4, 8, 128>}, {transform_indices = @transform_3, window_bounds = array<i64: 1, 4, 8, 128>}, {transform_indices = @transform_4, window_bounds = array<i64: 1, 4, 8, 128>}, {transform_indices = @transform_5, window_bounds = array<i64: 1, 4, 8, 128>}]} {
    %c10_i32 = arith.constant 10 : i32
    %0 = arith.muli %arg0, %c10_i32 : i32
    %c0_i32 = arith.constant 0 : i32
    %1 = arith.addi %0, %c0_i32 : i32
    %2 = arith.index_cast %1 : i32 to index
    %3 = memref.load %arg2[%2] : memref<20xf32, #tpu.memory_space<smem>>
    %c1_i32 = arith.constant 1 : i32
    %4 = arith.addi %0, %c1_i32 : i32
    %5 = arith.index_cast %4 : i32 to index
    %6 = memref.load %arg2[%5] : memref<20xf32, #tpu.memory_space<smem>>
    %c2_i32 = arith.constant 2 : i32
    %7 = arith.addi %0, %c2_i32 : i32
    %8 = arith.index_cast %7 : i32 to index
    %9 = memref.load %arg2[%8] : memref<20xf32, #tpu.memory_space<smem>>
    %c3_i32 = arith.constant 3 : i32
    %10 = arith.addi %0, %c3_i32 : i32
    %11 = arith.index_cast %10 : i32 to index
    %12 = memref.load %arg2[%11] : memref<20xf32, #tpu.memory_space<smem>>
    %c4_i32 = arith.constant 4 : i32
    %13 = arith.addi %0, %c4_i32 : i32
    %14 = arith.index_cast %13 : i32 to index
    %15 = memref.load %arg2[%14] : memref<20xf32, #tpu.memory_space<smem>>
    %c5_i32 = arith.constant 5 : i32
    %16 = arith.addi %0, %c5_i32 : i32
    %17 = arith.index_cast %16 : i32 to index
    %18 = memref.load %arg2[%17] : memref<20xf32, #tpu.memory_space<smem>>
    %c6_i32 = arith.constant 6 : i32
    %19 = arith.addi %0, %c6_i32 : i32
    %20 = arith.index_cast %19 : i32 to index
    %21 = memref.load %arg2[%20] : memref<20xf32, #tpu.memory_space<smem>>
    %c7_i32 = arith.constant 7 : i32
    %22 = arith.addi %0, %c7_i32 : i32
    %23 = arith.index_cast %22 : i32 to index
    %24 = memref.load %arg2[%23] : memref<20xf32, #tpu.memory_space<smem>>
    %c8_i32 = arith.constant 8 : i32
    %25 = arith.addi %0, %c8_i32 : i32
    %26 = arith.index_cast %25 : i32 to index
    %27 = memref.load %arg2[%26] : memref<20xf32, #tpu.memory_space<smem>>
    %c9_i32 = arith.constant 9 : i32
    %28 = arith.addi %0, %c9_i32 : i32
    %29 = arith.index_cast %28 : i32 to index
    %30 = memref.load %arg2[%29] : memref<20xf32, #tpu.memory_space<smem>>
    %31 = arith.index_cast %arg0 : i32 to index
    %32 = memref.load %arg3[%31] : memref<2xi32, #tpu.memory_space<smem>>
    %33 = tpu.iota {dimensions = array<i32: 0>} : vector<8x128xi32>
    %34 = tpu.iota {dimensions = array<i32: 1>} : vector<8x128xi32>
    %c1024_i32 = arith.constant 1024 : i32
    %35 = arith.muli %arg1, %c1024_i32 : i32
    %c128_i32 = arith.constant 128 : i32
    %36 = vector.broadcast %c128_i32 : i32 to vector<8x128xi32>
    %37 = arith.muli %33, %36 : vector<8x128xi32>
    %38 = vector.broadcast %35 : i32 to vector<8x128xi32>
    %39 = arith.addi %38, %37 : vector<8x128xi32>
    %40 = arith.addi %39, %34 : vector<8x128xi32>
    %41 = arith.sitofp %40 : vector<8x128xi32> to vector<8x128xf32>
    %cst = arith.constant 5.000000e-01 : f32
    %42 = vector.broadcast %cst : f32 to vector<8x128xf32>
    %43 = arith.addf %41, %42 : vector<8x128xf32>
    %cst_0 = arith.constant 6.250000e-02 : f32
    %44 = vector.broadcast %cst_0 : f32 to vector<8x128xf32>
    %45 = arith.mulf %43, %44 : vector<8x128xf32>
    %46 = arith.fptosi %45 : vector<8x128xf32> to vector<8x128xi32>
    %47 = arith.sitofp %46 : vector<8x128xi32> to vector<8x128xf32>
    %cst_1 = arith.constant 1.600000e+01 : f32
    %48 = vector.broadcast %cst_1 : f32 to vector<8x128xf32>
    %49 = arith.mulf %47, %48 : vector<8x128xf32>
    %50 = arith.subf %41, %49 : vector<8x128xf32>
    %cst_2 = arith.constant 5.000000e-01 : f32
    %51 = vector.broadcast %cst_2 : f32 to vector<8x128xf32>
    %52 = arith.addf %50, %51 : vector<8x128xf32>
    %cst_3 = arith.constant 6.250000e-02 : f32
    %53 = vector.broadcast %cst_3 : f32 to vector<8x128xf32>
    %54 = arith.mulf %52, %53 : vector<8x128xf32>
    %55 = vector.broadcast %15 : f32 to vector<8x128xf32>
    %56 = arith.subf %54, %55 : vector<8x128xf32>
    %57 = math.absf %56 : vector<8x128xf32>
    %58 = vector.broadcast %21 : f32 to vector<8x128xf32>
    %59 = arith.cmpf oge, %57, %58 : vector<8x128xf32>
    %cst_4 = arith.constant 5.000000e-01 : f32
    %60 = vector.broadcast %cst_4 : f32 to vector<8x128xf32>
    %61 = arith.addf %47, %60 : vector<8x128xf32>
    %cst_5 = arith.constant 6.250000e-02 : f32
    %62 = vector.broadcast %cst_5 : f32 to vector<8x128xf32>
    %63 = arith.mulf %61, %62 : vector<8x128xf32>
    %64 = vector.broadcast %18 : f32 to vector<8x128xf32>
    %65 = arith.subf %63, %64 : vector<8x128xf32>
    %66 = math.absf %65 : vector<8x128xf32>
    %67 = vector.broadcast %24 : f32 to vector<8x128xf32>
    %68 = arith.cmpf oge, %66, %67 : vector<8x128xf32>
    %69 = arith.ori %59, %68 : vector<8x128xi1>
    %70 = arith.extui %69 : vector<8x128xi1> to vector<8x128xi32>
    %71 = arith.sitofp %70 : vector<8x128xi32> to vector<8x128xf32>
    %72 = tpu.iota {dimensions = array<i32: 0>} : vector<4x8x128xi32>
    %c1024_i32_6 = arith.constant 1024 : i32
    %73 = vector.broadcast %c1024_i32_6 : i32 to vector<4x8x128xi32>
    %74 = arith.muli %72, %73 : vector<4x8x128xi32>
    %75 = vector.shape_cast %40 : vector<8x128xi32> to vector<1x8x128xi32>
    %76 = vector.broadcast %75 : vector<1x8x128xi32> to vector<4x8x128xi32>
    %77 = arith.addi %76, %74 : vector<4x8x128xi32>
    %78 = vector.broadcast %32 : i32 to vector<4x8x128xi32>
    %79 = arith.addi %77, %78 : vector<4x8x128xi32>
    %c0 = arith.constant 0 : index
    %c0_7 = arith.constant 0 : index
    %c0_8 = arith.constant 0 : index
    %c0_9 = arith.constant 0 : index
    %80 = vector.load %arg4[%c0, %c0_7, %c0_8, %c0_9] : memref<1x4x8x128xf32, #tpu.memory_space<vmem>>, vector<1x4x8x128xf32>
    %81 = vector.shape_cast %80 : vector<1x4x8x128xf32> to vector<4x8x128xf32>
    %82 = vector.broadcast %3 : f32 to vector<4x8x128xf32>
    %83 = arith.addf %81, %82 : vector<4x8x128xf32>
    %84 = arith.addf %27, %3 : f32
    %85 = vector.broadcast %84 : f32 to vector<4x8x128xf32>
    %86 = arith.subf %83, %85 : vector<4x8x128xf32>
    %87 = vector.broadcast %6 : f32 to vector<4x8x128xf32>
    %88 = arith.mulf %86, %87 : vector<4x8x128xf32>
    %89 = vector.broadcast %84 : f32 to vector<4x8x128xf32>
    %90 = arith.addf %88, %89 : vector<4x8x128xf32>
    %cst_10 = arith.constant dense<0.000000e+00> : vector<8x128xf32>
    %91 = vector.multi_reduction <add>, %90, %cst_10 [0] : vector<4x8x128xf32> to vector<8x128xf32>
    %92 = vector.shape_cast %91 : vector<8x128xf32> to vector<1x8x128xf32>
    %cst_11 = arith.constant 4.000000e+00 : f32
    %93 = vector.broadcast %cst_11 : f32 to vector<1x8x128xf32>
    %94 = arith.divf %92, %93 : vector<1x8x128xf32>
    %95 = vector.broadcast %94 : vector<1x8x128xf32> to vector<4x8x128xf32>
    %96 = arith.subf %90, %95 : vector<4x8x128xf32>
    %97 = vector.broadcast %9 : f32 to vector<4x8x128xf32>
    %98 = arith.mulf %96, %97 : vector<4x8x128xf32>
    %99 = vector.broadcast %94 : vector<1x8x128xf32> to vector<4x8x128xf32>
    %100 = arith.addf %98, %99 : vector<4x8x128xf32>
    %101 = vector.shape_cast %71 : vector<8x128xf32> to vector<1x8x128xf32>
    %102 = vector.broadcast %101 : vector<1x8x128xf32> to vector<4x8x128xf32>
    %103 = arith.mulf %100, %102 : vector<4x8x128xf32>
    %c0_12 = arith.constant 0 : index
    %c0_13 = arith.constant 0 : index
    %c0_14 = arith.constant 0 : index
    %c0_15 = arith.constant 0 : index
    %104 = vector.load %arg6[%c0_12, %c0_13, %c0_14, %c0_15] : memref<1x4x8x128xf32, #tpu.memory_space<vmem>>, vector<1x4x8x128xf32>
    %105 = vector.shape_cast %104 : vector<1x4x8x128xf32> to vector<4x8x128xf32>
    %106 = vector.shape_cast %103 : vector<4x8x128xf32> to vector<1x4x8x128xf32>
    tpu.vector_store %arg6[%c0_12, %c0_13, %c0_14, %c0_15], %106 {strides = array<i32>} : memref<1x4x8x128xf32, #tpu.memory_space<vmem>>, vector<1x4x8x128xf32>,
    %cst_16 = arith.constant 0.000000e+00 : f32
    %107 = arith.cmpf ogt, %12, %cst_16 : f32
    %108 = arith.extui %107 : i1 to i32
    %c0_i32_17 = arith.constant 0 : i32
    %109 = arith.cmpi ne, %108, %c0_i32_17 : i32
    scf.if %109 {
      %c1540483477_i32 = arith.constant 1540483477 : i32
      %140 = vector.broadcast %c1540483477_i32 : i32 to vector<4x8x128xi32>
      %141 = arith.addi %79, %140 : vector<4x8x128xi32>
      %c16_i32 = arith.constant 16 : i32
      %142 = vector.broadcast %c16_i32 : i32 to vector<4x8x128xi32>
      %143 = arith.shrsi %141, %142 : vector<4x8x128xi32>
      %c65535_i32 = arith.constant 65535 : i32
      %144 = vector.broadcast %c65535_i32 : i32 to vector<4x8x128xi32>
      %145 = arith.andi %143, %144 : vector<4x8x128xi32>
      %146 = arith.xori %141, %145 : vector<4x8x128xi32>
      %c-2048144789_i32 = arith.constant -2048144789 : i32
      %147 = vector.broadcast %c-2048144789_i32 : i32 to vector<4x8x128xi32>
      %148 = arith.muli %146, %147 : vector<4x8x128xi32>
      %c13_i32 = arith.constant 13 : i32
      %149 = vector.broadcast %c13_i32 : i32 to vector<4x8x128xi32>
      %150 = arith.shrsi %148, %149 : vector<4x8x128xi32>
      %c524287_i32 = arith.constant 524287 : i32
      %151 = vector.broadcast %c524287_i32 : i32 to vector<4x8x128xi32>
      %152 = arith.andi %150, %151 : vector<4x8x128xi32>
      %153 = arith.xori %148, %152 : vector<4x8x128xi32>
      %c-1028477387_i32 = arith.constant -1028477387 : i32
      %154 = vector.broadcast %c-1028477387_i32 : i32 to vector<4x8x128xi32>
      %155 = arith.muli %153, %154 : vector<4x8x128xi32>
      %c16_i32_30 = arith.constant 16 : i32
      %156 = vector.broadcast %c16_i32_30 : i32 to vector<4x8x128xi32>
      %157 = arith.shrsi %155, %156 : vector<4x8x128xi32>
      %c65535_i32_31 = arith.constant 65535 : i32
      %158 = vector.broadcast %c65535_i32_31 : i32 to vector<4x8x128xi32>
      %159 = arith.andi %157, %158 : vector<4x8x128xi32>
      %160 = arith.xori %155, %159 : vector<4x8x128xi32>
      %c65535_i32_32 = arith.constant 65535 : i32
      %161 = vector.broadcast %c65535_i32_32 : i32 to vector<4x8x128xi32>
      %162 = arith.andi %160, %161 : vector<4x8x128xi32>
      %163 = arith.sitofp %162 : vector<4x8x128xi32> to vector<4x8x128xf32>
      %c16_i32_33 = arith.constant 16 : i32
      %164 = vector.broadcast %c16_i32_33 : i32 to vector<4x8x128xi32>
      %165 = arith.shrsi %160, %164 : vector<4x8x128xi32>
      %c65535_i32_34 = arith.constant 65535 : i32
      %166 = vector.broadcast %c65535_i32_34 : i32 to vector<4x8x128xi32>
      %167 = arith.andi %165, %166 : vector<4x8x128xi32>
      %168 = arith.sitofp %167 : vector<4x8x128xi32> to vector<4x8x128xf32>
      %169 = arith.addf %163, %168 : vector<4x8x128xf32>
      %cst_35 = arith.constant 1.52587891E-5 : f32
      %170 = vector.broadcast %cst_35 : f32 to vector<4x8x128xf32>
      %171 = arith.mulf %169, %170 : vector<4x8x128xf32>
      %c-1740579596_i32 = arith.constant -1740579596 : i32
      %172 = vector.broadcast %c-1740579596_i32 : i32 to vector<4x8x128xi32>
      %173 = arith.addi %79, %172 : vector<4x8x128xi32>
      %c16_i32_36 = arith.constant 16 : i32
      %174 = vector.broadcast %c16_i32_36 : i32 to vector<4x8x128xi32>
      %175 = arith.shrsi %173, %174 : vector<4x8x128xi32>
      %c65535_i32_37 = arith.constant 65535 : i32
      %176 = vector.broadcast %c65535_i32_37 : i32 to vector<4x8x128xi32>
      %177 = arith.andi %175, %176 : vector<4x8x128xi32>
      %178 = arith.xori %173, %177 : vector<4x8x128xi32>
      %c-2048144789_i32_38 = arith.constant -2048144789 : i32
      %179 = vector.broadcast %c-2048144789_i32_38 : i32 to vector<4x8x128xi32>
      %180 = arith.muli %178, %179 : vector<4x8x128xi32>
      %c13_i32_39 = arith.constant 13 : i32
      %181 = vector.broadcast %c13_i32_39 : i32 to vector<4x8x128xi32>
      %182 = arith.shrsi %180, %181 : vector<4x8x128xi32>
      %c524287_i32_40 = arith.constant 524287 : i32
      %183 = vector.broadcast %c524287_i32_40 : i32 to vector<4x8x128xi32>
      %184 = arith.andi %182, %183 : vector<4x8x128xi32>
      %185 = arith.xori %180, %184 : vector<4x8x128xi32>
      %c-1028477387_i32_41 = arith.constant -1028477387 : i32
      %186 = vector.broadcast %c-1028477387_i32_41 : i32 to vector<4x8x128xi32>
      %187 = arith.muli %185, %186 : vector<4x8x128xi32>
      %c16_i32_42 = arith.constant 16 : i32
      %188 = vector.broadcast %c16_i32_42 : i32 to vector<4x8x128xi32>
      %189 = arith.shrsi %187, %188 : vector<4x8x128xi32>
      %c65535_i32_43 = arith.constant 65535 : i32
      %190 = vector.broadcast %c65535_i32_43 : i32 to vector<4x8x128xi32>
      %191 = arith.andi %189, %190 : vector<4x8x128xi32>
      %192 = arith.xori %187, %191 : vector<4x8x128xi32>
      %c65535_i32_44 = arith.constant 65535 : i32
      %193 = vector.broadcast %c65535_i32_44 : i32 to vector<4x8x128xi32>
      %194 = arith.andi %192, %193 : vector<4x8x128xi32>
      %195 = arith.sitofp %194 : vector<4x8x128xi32> to vector<4x8x128xf32>
      %c16_i32_45 = arith.constant 16 : i32
      %196 = vector.broadcast %c16_i32_45 : i32 to vector<4x8x128xi32>
      %197 = arith.shrsi %192, %196 : vector<4x8x128xi32>
      %c65535_i32_46 = arith.constant 65535 : i32
      %198 = vector.broadcast %c65535_i32_46 : i32 to vector<4x8x128xi32>
      %199 = arith.andi %197, %198 : vector<4x8x128xi32>
      %200 = arith.sitofp %199 : vector<4x8x128xi32> to vector<4x8x128xf32>
      %201 = arith.addf %195, %200 : vector<4x8x128xf32>
      %cst_47 = arith.constant 1.52587891E-5 : f32
      %202 = vector.broadcast %cst_47 : f32 to vector<4x8x128xf32>
      %203 = arith.mulf %201, %202 : vector<4x8x128xf32>
      %204 = arith.addf %171, %203 : vector<4x8x128xf32>
      %c-726675373_i32 = arith.constant -726675373 : i32
      %205 = vector.broadcast %c-726675373_i32 : i32 to vector<4x8x128xi32>
      %206 = arith.addi %79, %205 : vector<4x8x128xi32>
      %c16_i32_48 = arith.constant 16 : i32
      %207 = vector.broadcast %c16_i32_48 : i32 to vector<4x8x128xi32>
      %208 = arith.shrsi %206, %207 : vector<4x8x128xi32>
      %c65535_i32_49 = arith.constant 65535 : i32
      %209 = vector.broadcast %c65535_i32_49 : i32 to vector<4x8x128xi32>
      %210 = arith.andi %208, %209 : vector<4x8x128xi32>
      %211 = arith.xori %206, %210 : vector<4x8x128xi32>
      %c-2048144789_i32_50 = arith.constant -2048144789 : i32
      %212 = vector.broadcast %c-2048144789_i32_50 : i32 to vector<4x8x128xi32>
      %213 = arith.muli %211, %212 : vector<4x8x128xi32>
      %c13_i32_51 = arith.constant 13 : i32
      %214 = vector.broadcast %c13_i32_51 : i32 to vector<4x8x128xi32>
      %215 = arith.shrsi %213, %214 : vector<4x8x128xi32>
      %c524287_i32_52 = arith.constant 524287 : i32
      %216 = vector.broadcast %c524287_i32_52 : i32 to vector<4x8x128xi32>
      %217 = arith.andi %215, %216 : vector<4x8x128xi32>
      %218 = arith.xori %213, %217 : vector<4x8x128xi32>
      %c-1028477387_i32_53 = arith.constant -1028477387 : i32
      %219 = vector.broadcast %c-1028477387_i32_53 : i32 to vector<4x8x128xi32>
      %220 = arith.muli %218, %219 : vector<4x8x128xi32>
      %c16_i32_54 = arith.constant 16 : i32
      %221 = vector.broadcast %c16_i32_54 : i32 to vector<4x8x128xi32>
      %222 = arith.shrsi %220, %221 : vector<4x8x128xi32>
      %c65535_i32_55 = arith.constant 65535 : i32
      %223 = vector.broadcast %c65535_i32_55 : i32 to vector<4x8x128xi32>
      %224 = arith.andi %222, %223 : vector<4x8x128xi32>
      %225 = arith.xori %220, %224 : vector<4x8x128xi32>
      %c65535_i32_56 = arith.constant 65535 : i32
      %226 = vector.broadcast %c65535_i32_56 : i32 to vector<4x8x128xi32>
      %227 = arith.andi %225, %226 : vector<4x8x128xi32>
      %228 = arith.sitofp %227 : vector<4x8x128xi32> to vector<4x8x128xf32>
      %c16_i32_57 = arith.constant 16 : i32
      %229 = vector.broadcast %c16_i32_57 : i32 to vector<4x8x128xi32>
      %230 = arith.shrsi %225, %229 : vector<4x8x128xi32>
      %c65535_i32_58 = arith.constant 65535 : i32
      %231 = vector.broadcast %c65535_i32_58 : i32 to vector<4x8x128xi32>
      %232 = arith.andi %230, %231 : vector<4x8x128xi32>
      %233 = arith.sitofp %232 : vector<4x8x128xi32> to vector<4x8x128xf32>
      %234 = arith.addf %228, %233 : vector<4x8x128xf32>
      %cst_59 = arith.constant 1.52587891E-5 : f32
      %235 = vector.broadcast %cst_59 : f32 to vector<4x8x128xf32>
      %236 = arith.mulf %234, %235 : vector<4x8x128xf32>
      %237 = arith.addf %204, %236 : vector<4x8x128xf32>
      %cst_60 = arith.constant 3.000000e+00 : f32
      %238 = vector.broadcast %cst_60 : f32 to vector<4x8x128xf32>
      %239 = arith.subf %237, %238 : vector<4x8x128xf32>
      %cst_61 = arith.constant 1.41421354 : f32
      %240 = vector.broadcast %cst_61 : f32 to vector<4x8x128xf32>
      %241 = arith.mulf %239, %240 : vector<4x8x128xf32>
      %c0_62 = arith.constant 0 : index
      %c0_63 = arith.constant 0 : index
      %c0_64 = arith.constant 0 : index
      %c0_65 = arith.constant 0 : index
      %242 = vector.load %arg6[%c0_62, %c0_63, %c0_64, %c0_65] : memref<1x4x8x128xf32, #tpu.memory_space<vmem>>, vector<1x4x8x128xf32>
      %243 = vector.shape_cast %242 : vector<1x4x8x128xf32> to vector<4x8x128xf32>
      %244 = vector.broadcast %12 : f32 to vector<4x8x128xf32>
      %245 = arith.mulf %241, %244 : vector<4x8x128xf32>
      %246 = vector.shape_cast %71 : vector<8x128xf32> to vector<1x8x128xf32>
      %247 = vector.broadcast %246 : vector<1x8x128xf32> to vector<4x8x128xf32>
      %248 = arith.mulf %245, %247 : vector<4x8x128xf32>
      %249 = arith.addf %243, %248 : vector<4x8x128xf32>
      %c0_66 = arith.constant 0 : index
      %c0_67 = arith.constant 0 : index
      %c0_68 = arith.constant 0 : index
      %c0_69 = arith.constant 0 : index
      %250 = vector.load %arg6[%c0_66, %c0_67, %c0_68, %c0_69] : memref<1x4x8x128xf32, #tpu.memory_space<vmem>>, vector<1x4x8x128xf32>
      %251 = vector.shape_cast %250 : vector<1x4x8x128xf32> to vector<4x8x128xf32>
      %252 = vector.shape_cast %249 : vector<4x8x128xf32> to vector<1x4x8x128xf32>
      tpu.vector_store %arg6[%c0_66, %c0_67, %c0_68, %c0_69], %252 {strides = array<i32>} : memref<1x4x8x128xf32, #tpu.memory_space<vmem>>, vector<1x4x8x128xf32>,
    } else {
    }
    %c0_18 = arith.constant 0 : index
    %c0_19 = arith.constant 0 : index
    %c0_20 = arith.constant 0 : index
    %c0_21 = arith.constant 0 : index
    %110 = vector.load %arg5[%c0_18, %c0_19, %c0_20, %c0_21] : memref<1x4x8x128xf32, #tpu.memory_space<vmem>>, vector<1x4x8x128xf32>
    %111 = vector.shape_cast %110 : vector<1x4x8x128xf32> to vector<4x8x128xf32>
    %112 = vector.broadcast %3 : f32 to vector<4x8x128xf32>
    %113 = arith.addf %111, %112 : vector<4x8x128xf32>
    %114 = arith.addf %30, %3 : f32
    %115 = vector.broadcast %114 : f32 to vector<4x8x128xf32>
    %116 = arith.subf %113, %115 : vector<4x8x128xf32>
    %117 = vector.broadcast %6 : f32 to vector<4x8x128xf32>
    %118 = arith.mulf %116, %117 : vector<4x8x128xf32>
    %119 = vector.broadcast %114 : f32 to vector<4x8x128xf32>
    %120 = arith.addf %118, %119 : vector<4x8x128xf32>
    %cst_22 = arith.constant dense<0.000000e+00> : vector<8x128xf32>
    %121 = vector.multi_reduction <add>, %120, %cst_22 [0] : vector<4x8x128xf32> to vector<8x128xf32>
    %122 = vector.shape_cast %121 : vector<8x128xf32> to vector<1x8x128xf32>
    %cst_23 = arith.constant 4.000000e+00 : f32
    %123 = vector.broadcast %cst_23 : f32 to vector<1x8x128xf32>
    %124 = arith.divf %122, %123 : vector<1x8x128xf32>
    %125 = vector.broadcast %124 : vector<1x8x128xf32> to vector<4x8x128xf32>
    %126 = arith.subf %120, %125 : vector<4x8x128xf32>
    %127 = vector.broadcast %9 : f32 to vector<4x8x128xf32>
    %128 = arith.mulf %126, %127 : vector<4x8x128xf32>
    %129 = vector.broadcast %124 : vector<1x8x128xf32> to vector<4x8x128xf32>
    %130 = arith.addf %128, %129 : vector<4x8x128xf32>
    %131 = vector.shape_cast %71 : vector<8x128xf32> to vector<1x8x128xf32>
    %132 = vector.broadcast %131 : vector<1x8x128xf32> to vector<4x8x128xf32>
    %133 = arith.mulf %130, %132 : vector<4x8x128xf32>
    %c0_24 = arith.constant 0 : index
    %c0_25 = arith.constant 0 : index
    %c0_26 = arith.constant 0 : index
    %c0_27 = arith.constant 0 : index
    %134 = vector.load %arg7[%c0_24, %c0_25, %c0_26, %c0_27] : memref<1x4x8x128xf32, #tpu.memory_space<vmem>>, vector<1x4x8x128xf32>
    %135 = vector.shape_cast %134 : vector<1x4x8x128xf32> to vector<4x8x128xf32>
    %136 = vector.shape_cast %133 : vector<4x8x128xf32> to vector<1x4x8x128xf32>
    tpu.vector_store %arg7[%c0_24, %c0_25, %c0_26, %c0_27], %136 {strides = array<i32>} : memref<1x4x8x128xf32, #tpu.memory_space<vmem>>, vector<1x4x8x128xf32>,
    %cst_28 = arith.constant 0.000000e+00 : f32
    %137 = arith.cmpf ogt, %12, %cst_28 : f32
    %138 = arith.extui %137 : i1 to i32
    %c0_i32_29 = arith.constant 0 : i32
    %139 = arith.cmpi ne, %138, %c0_i32_29 : i32
    scf.if %139 {
      %c668265263_i32 = arith.constant 668265263 : i32
      %140 = vector.broadcast %c668265263_i32 : i32 to vector<4x8x128xi32>
      %141 = arith.addi %79, %140 : vector<4x8x128xi32>
      %c16_i32 = arith.constant 16 : i32
      %142 = vector.broadcast %c16_i32 : i32 to vector<4x8x128xi32>
      %143 = arith.shrsi %141, %142 : vector<4x8x128xi32>
      %c65535_i32 = arith.constant 65535 : i32
      %144 = vector.broadcast %c65535_i32 : i32 to vector<4x8x128xi32>
      %145 = arith.andi %143, %144 : vector<4x8x128xi32>
      %146 = arith.xori %141, %145 : vector<4x8x128xi32>
      %c-2048144789_i32 = arith.constant -2048144789 : i32
      %147 = vector.broadcast %c-2048144789_i32 : i32 to vector<4x8x128xi32>
      %148 = arith.muli %146, %147 : vector<4x8x128xi32>
      %c13_i32 = arith.constant 13 : i32
      %149 = vector.broadcast %c13_i32 : i32 to vector<4x8x128xi32>
      %150 = arith.shrsi %148, %149 : vector<4x8x128xi32>
      %c524287_i32 = arith.constant 524287 : i32
      %151 = vector.broadcast %c524287_i32 : i32 to vector<4x8x128xi32>
      %152 = arith.andi %150, %151 : vector<4x8x128xi32>
      %153 = arith.xori %148, %152 : vector<4x8x128xi32>
      %c-1028477387_i32 = arith.constant -1028477387 : i32
      %154 = vector.broadcast %c-1028477387_i32 : i32 to vector<4x8x128xi32>
      %155 = arith.muli %153, %154 : vector<4x8x128xi32>
      %c16_i32_30 = arith.constant 16 : i32
      %156 = vector.broadcast %c16_i32_30 : i32 to vector<4x8x128xi32>
      %157 = arith.shrsi %155, %156 : vector<4x8x128xi32>
      %c65535_i32_31 = arith.constant 65535 : i32
      %158 = vector.broadcast %c65535_i32_31 : i32 to vector<4x8x128xi32>
      %159 = arith.andi %157, %158 : vector<4x8x128xi32>
      %160 = arith.xori %155, %159 : vector<4x8x128xi32>
      %c65535_i32_32 = arith.constant 65535 : i32
      %161 = vector.broadcast %c65535_i32_32 : i32 to vector<4x8x128xi32>
      %162 = arith.andi %160, %161 : vector<4x8x128xi32>
      %163 = arith.sitofp %162 : vector<4x8x128xi32> to vector<4x8x128xf32>
      %c16_i32_33 = arith.constant 16 : i32
      %164 = vector.broadcast %c16_i32_33 : i32 to vector<4x8x128xi32>
      %165 = arith.shrsi %160, %164 : vector<4x8x128xi32>
      %c65535_i32_34 = arith.constant 65535 : i32
      %166 = vector.broadcast %c65535_i32_34 : i32 to vector<4x8x128xi32>
      %167 = arith.andi %165, %166 : vector<4x8x128xi32>
      %168 = arith.sitofp %167 : vector<4x8x128xi32> to vector<4x8x128xf32>
      %169 = arith.addf %163, %168 : vector<4x8x128xf32>
      %cst_35 = arith.constant 1.52587891E-5 : f32
      %170 = vector.broadcast %cst_35 : f32 to vector<4x8x128xf32>
      %171 = arith.mulf %169, %170 : vector<4x8x128xf32>
      %c1682169486_i32 = arith.constant 1682169486 : i32
      %172 = vector.broadcast %c1682169486_i32 : i32 to vector<4x8x128xi32>
      %173 = arith.addi %79, %172 : vector<4x8x128xi32>
      %c16_i32_36 = arith.constant 16 : i32
      %174 = vector.broadcast %c16_i32_36 : i32 to vector<4x8x128xi32>
      %175 = arith.shrsi %173, %174 : vector<4x8x128xi32>
      %c65535_i32_37 = arith.constant 65535 : i32
      %176 = vector.broadcast %c65535_i32_37 : i32 to vector<4x8x128xi32>
      %177 = arith.andi %175, %176 : vector<4x8x128xi32>
      %178 = arith.xori %173, %177 : vector<4x8x128xi32>
      %c-2048144789_i32_38 = arith.constant -2048144789 : i32
      %179 = vector.broadcast %c-2048144789_i32_38 : i32 to vector<4x8x128xi32>
      %180 = arith.muli %178, %179 : vector<4x8x128xi32>
      %c13_i32_39 = arith.constant 13 : i32
      %181 = vector.broadcast %c13_i32_39 : i32 to vector<4x8x128xi32>
      %182 = arith.shrsi %180, %181 : vector<4x8x128xi32>
      %c524287_i32_40 = arith.constant 524287 : i32
      %183 = vector.broadcast %c524287_i32_40 : i32 to vector<4x8x128xi32>
      %184 = arith.andi %182, %183 : vector<4x8x128xi32>
      %185 = arith.xori %180, %184 : vector<4x8x128xi32>
      %c-1028477387_i32_41 = arith.constant -1028477387 : i32
      %186 = vector.broadcast %c-1028477387_i32_41 : i32 to vector<4x8x128xi32>
      %187 = arith.muli %185, %186 : vector<4x8x128xi32>
      %c16_i32_42 = arith.constant 16 : i32
      %188 = vector.broadcast %c16_i32_42 : i32 to vector<4x8x128xi32>
      %189 = arith.shrsi %187, %188 : vector<4x8x128xi32>
      %c65535_i32_43 = arith.constant 65535 : i32
      %190 = vector.broadcast %c65535_i32_43 : i32 to vector<4x8x128xi32>
      %191 = arith.andi %189, %190 : vector<4x8x128xi32>
      %192 = arith.xori %187, %191 : vector<4x8x128xi32>
      %c65535_i32_44 = arith.constant 65535 : i32
      %193 = vector.broadcast %c65535_i32_44 : i32 to vector<4x8x128xi32>
      %194 = arith.andi %192, %193 : vector<4x8x128xi32>
      %195 = arith.sitofp %194 : vector<4x8x128xi32> to vector<4x8x128xf32>
      %c16_i32_45 = arith.constant 16 : i32
      %196 = vector.broadcast %c16_i32_45 : i32 to vector<4x8x128xi32>
      %197 = arith.shrsi %192, %196 : vector<4x8x128xi32>
      %c65535_i32_46 = arith.constant 65535 : i32
      %198 = vector.broadcast %c65535_i32_46 : i32 to vector<4x8x128xi32>
      %199 = arith.andi %197, %198 : vector<4x8x128xi32>
      %200 = arith.sitofp %199 : vector<4x8x128xi32> to vector<4x8x128xf32>
      %201 = arith.addf %195, %200 : vector<4x8x128xf32>
      %cst_47 = arith.constant 1.52587891E-5 : f32
      %202 = vector.broadcast %cst_47 : f32 to vector<4x8x128xf32>
      %203 = arith.mulf %201, %202 : vector<4x8x128xf32>
      %204 = arith.addf %171, %203 : vector<4x8x128xf32>
      %c-1598893587_i32 = arith.constant -1598893587 : i32
      %205 = vector.broadcast %c-1598893587_i32 : i32 to vector<4x8x128xi32>
      %206 = arith.addi %79, %205 : vector<4x8x128xi32>
      %c16_i32_48 = arith.constant 16 : i32
      %207 = vector.broadcast %c16_i32_48 : i32 to vector<4x8x128xi32>
      %208 = arith.shrsi %206, %207 : vector<4x8x128xi32>
      %c65535_i32_49 = arith.constant 65535 : i32
      %209 = vector.broadcast %c65535_i32_49 : i32 to vector<4x8x128xi32>
      %210 = arith.andi %208, %209 : vector<4x8x128xi32>
      %211 = arith.xori %206, %210 : vector<4x8x128xi32>
      %c-2048144789_i32_50 = arith.constant -2048144789 : i32
      %212 = vector.broadcast %c-2048144789_i32_50 : i32 to vector<4x8x128xi32>
      %213 = arith.muli %211, %212 : vector<4x8x128xi32>
      %c13_i32_51 = arith.constant 13 : i32
      %214 = vector.broadcast %c13_i32_51 : i32 to vector<4x8x128xi32>
      %215 = arith.shrsi %213, %214 : vector<4x8x128xi32>
      %c524287_i32_52 = arith.constant 524287 : i32
      %216 = vector.broadcast %c524287_i32_52 : i32 to vector<4x8x128xi32>
      %217 = arith.andi %215, %216 : vector<4x8x128xi32>
      %218 = arith.xori %213, %217 : vector<4x8x128xi32>
      %c-1028477387_i32_53 = arith.constant -1028477387 : i32
      %219 = vector.broadcast %c-1028477387_i32_53 : i32 to vector<4x8x128xi32>
      %220 = arith.muli %218, %219 : vector<4x8x128xi32>
      %c16_i32_54 = arith.constant 16 : i32
      %221 = vector.broadcast %c16_i32_54 : i32 to vector<4x8x128xi32>
      %222 = arith.shrsi %220, %221 : vector<4x8x128xi32>
      %c65535_i32_55 = arith.constant 65535 : i32
      %223 = vector.broadcast %c65535_i32_55 : i32 to vector<4x8x128xi32>
      %224 = arith.andi %222, %223 : vector<4x8x128xi32>
      %225 = arith.xori %220, %224 : vector<4x8x128xi32>
      %c65535_i32_56 = arith.constant 65535 : i32
      %226 = vector.broadcast %c65535_i32_56 : i32 to vector<4x8x128xi32>
      %227 = arith.andi %225, %226 : vector<4x8x128xi32>
      %228 = arith.sitofp %227 : vector<4x8x128xi32> to vector<4x8x128xf32>
      %c16_i32_57 = arith.constant 16 : i32
      %229 = vector.broadcast %c16_i32_57 : i32 to vector<4x8x128xi32>
      %230 = arith.shrsi %225, %229 : vector<4x8x128xi32>
      %c65535_i32_58 = arith.constant 65535 : i32
      %231 = vector.broadcast %c65535_i32_58 : i32 to vector<4x8x128xi32>
      %232 = arith.andi %230, %231 : vector<4x8x128xi32>
      %233 = arith.sitofp %232 : vector<4x8x128xi32> to vector<4x8x128xf32>
      %234 = arith.addf %228, %233 : vector<4x8x128xf32>
      %cst_59 = arith.constant 1.52587891E-5 : f32
      %235 = vector.broadcast %cst_59 : f32 to vector<4x8x128xf32>
      %236 = arith.mulf %234, %235 : vector<4x8x128xf32>
      %237 = arith.addf %204, %236 : vector<4x8x128xf32>
      %cst_60 = arith.constant 3.000000e+00 : f32
      %238 = vector.broadcast %cst_60 : f32 to vector<4x8x128xf32>
      %239 = arith.subf %237, %238 : vector<4x8x128xf32>
      %cst_61 = arith.constant 1.41421354 : f32
      %240 = vector.broadcast %cst_61 : f32 to vector<4x8x128xf32>
      %241 = arith.mulf %239, %240 : vector<4x8x128xf32>
      %c0_62 = arith.constant 0 : index
      %c0_63 = arith.constant 0 : index
      %c0_64 = arith.constant 0 : index
      %c0_65 = arith.constant 0 : index
      %242 = vector.load %arg7[%c0_62, %c0_63, %c0_64, %c0_65] : memref<1x4x8x128xf32, #tpu.memory_space<vmem>>, vector<1x4x8x128xf32>
      %243 = vector.shape_cast %242 : vector<1x4x8x128xf32> to vector<4x8x128xf32>
      %244 = vector.broadcast %12 : f32 to vector<4x8x128xf32>
      %245 = arith.mulf %241, %244 : vector<4x8x128xf32>
      %246 = vector.shape_cast %71 : vector<8x128xf32> to vector<1x8x128xf32>
      %247 = vector.broadcast %246 : vector<1x8x128xf32> to vector<4x8x128xf32>
      %248 = arith.mulf %245, %247 : vector<4x8x128xf32>
      %249 = arith.addf %243, %248 : vector<4x8x128xf32>
      %c0_66 = arith.constant 0 : index
      %c0_67 = arith.constant 0 : index
      %c0_68 = arith.constant 0 : index
      %c0_69 = arith.constant 0 : index
      %250 = vector.load %arg7[%c0_66, %c0_67, %c0_68, %c0_69] : memref<1x4x8x128xf32, #tpu.memory_space<vmem>>, vector<1x4x8x128xf32>
      %251 = vector.shape_cast %250 : vector<1x4x8x128xf32> to vector<4x8x128xf32>
      %252 = vector.shape_cast %249 : vector<4x8x128xf32> to vector<1x4x8x128xf32>
      tpu.vector_store %arg7[%c0_66, %c0_67, %c0_68, %c0_69], %252 {strides = array<i32>} : memref<1x4x8x128xf32, #tpu.memory_space<vmem>>, vector<1x4x8x128xf32>,
    } else {
    }
    return
  }
  func.func @transform_0(%arg0: i32, %arg1: i32) -> i32 {
    %c0_i32 = arith.constant 0 : i32
    %c0_i32_0 = arith.constant 0 : i32
    return %c0_i32 : i32
  }
  func.func @transform_1(%arg0: i32, %arg1: i32) -> i32 {
    %c0_i32 = arith.constant 0 : i32
    %c0_i32_0 = arith.constant 0 : i32
    return %c0_i32 : i32
  }
  func.func @transform_2(%arg0: i32, %arg1: i32) -> (i32, i32, i32, i32) {
    %c0_i32 = arith.constant 0 : i32
    %c0_i32_0 = arith.constant 0 : i32
    %c0_i32_1 = arith.constant 0 : i32
    return %arg0, %c0_i32, %arg1, %c0_i32_0 : i32, i32, i32, i32
  }
  func.func @transform_3(%arg0: i32, %arg1: i32) -> (i32, i32, i32, i32) {
    %c0_i32 = arith.constant 0 : i32
    %c0_i32_0 = arith.constant 0 : i32
    %c0_i32_1 = arith.constant 0 : i32
    return %arg0, %c0_i32, %arg1, %c0_i32_0 : i32, i32, i32, i32
  }
  func.func @transform_4(%arg0: i32, %arg1: i32) -> (i32, i32, i32, i32) {
    %c0_i32 = arith.constant 0 : i32
    %c0_i32_0 = arith.constant 0 : i32
    %c0_i32_1 = arith.constant 0 : i32
    return %arg0, %c0_i32, %arg1, %c0_i32_0 : i32, i32, i32, i32
  }
  func.func @transform_5(%arg0: i32, %arg1: i32) -> (i32, i32, i32, i32) {
    %c0_i32 = arith.constant 0 : i32
    %c0_i32_0 = arith.constant 0 : i32
    %c0_i32_1 = arith.constant 0 : i32
    return %arg0, %c0_i32, %arg1, %c0_i32_0 : i32, i32, i32, i32
  }
}

</mosaic_0001>

<llo_original>
// kernel: tpu_custom_call.1
$region0: #{tpu_custom_call.1}
  #allocation0 [shape = 'u32[]', space=smem, size = 0x4, offset = 0x4, fixed_abs, tag = 'smem constant byte address 0x4 - core index']
  #allocation1 [shape = 'u32[144,128]{1,0:T(1,128)}', space=vmem, size = 0x12000, scoped, tag = 'internal scratch']
  %s0 = inlined_call_operand.hbm [shape: f32[20], index: 0, kind: input, shape index: {}]
  %s1 = inlined_call_operand.vmem [shape: s32[2], index: 1, kind: input, shape index: {}]
  %s2 = inlined_call_operand.hbm [shape: f32[2,4,8,128], index: 2, kind: input, shape index: {}]
  %s3 = inlined_call_operand.hbm [shape: f32[2,4,8,128], index: 3, kind: input, shape index: {}]
  %s4 = inlined_call_operand.hbm [shape: f32[2,4,8,128], index: 4, kind: output, shape index: {0}]
  %s5 = inlined_call_operand.hbm [shape: f32[2,4,8,128], index: 5, kind: output, shape index: {1}]
  %6 = xla_tuple %s4, %s5
  %s7 = sld [smem:[#allocation0]]
  $region81: #{tpu_custom_call.1} parent=0
    _
  %s9 = ssub.s32 1, %s7
  %s10 = scalar_select 0, %s9, %s7
  $region1: #{tpu_custom_call.1} parent=0
    #allocation2 [shape = 'u8[512]{0}', space=smem, size = 0x200, scoped, tag = 'input window, operand 0, single buffered']
    #allocation3 [shape = 's32[2]{0}', space=sflag, size = 0x8, scoped, tag = 'scoped memory for tpu_custom_call.1']
    #allocation4 [shape = 's32[2]{0}', space=sflag, size = 0x8, scoped, tag = 'scoped memory for tpu_custom_call.1']
    #allocation5 [shape = 's32[2]{0}', space=sflag, size = 0x8, scoped, tag = 'scoped memory for tpu_custom_call.1']
    #allocation6 [shape = 's32[2]{0}', space=sflag, size = 0x8, scoped, tag = 'scoped memory for tpu_custom_call.1']
    #allocation7 [shape = 'u8[512]{0}', space=smem, size = 0x200, scoped, tag = 'input window, operand 1, single buffered']
    #allocation8 [shape = 'u8[32768]{0}', space=vmem, size = 0x8000, scoped, tag = 'input window, operand 2']
    #allocation9 [shape = 'u8[32768]{0}', space=vmem, size = 0x8000, scoped, tag = 'input window, operand 3']
    #allocation10 [shape = 's32[2]{0}', space=sflag, size = 0x8, scoped, tag = 'scoped memory for tpu_custom_call.1']
    #allocation11 [shape = 'u8[32768]{0}', space=vmem, size = 0x8000, scoped, tag = 'output window, operand 0']
    #allocation12 [shape = 'u8[32768]{0}', space=vmem, size = 0x8000, scoped, tag = 'output window, operand 1']
    #allocation13 [shape = 's32[2]{0}', space=sflag, size = 0x8, scoped, tag = 'scoped memory for tpu_custom_call.1']
    %11 = vsyncpa [#allocation5], 0
    %12 = vsyncpa [#allocation6], 0
    %13 = vsyncpa [#allocation3], 0
    %s14 = scalar_lea.sflag [#allocation3], 1
    %15 = vsyncpa %s14, 0
    %16 = vsyncpa [#allocation10], 0
    %s17 = scalar_lea.sflag [#allocation10], 1
    %18 = vsyncpa %s17, 0
    %19 = vsyncpa [#allocation4], 0
    %s20 = scalar_lea.sflag [#allocation4], 1
    %21 = vsyncpa %s20, 0
    %22 = vsyncpa [#allocation13], 0
    %s23 = scalar_lea.sflag [#allocation13], 1
    %24 = vsyncpa %s23, 0
    loop: start=0, step=1, limit=4
    $region2: #{tpu_custom_call.1} parent=1 // loop_pre_header
      _
    $region3: #{tpu_custom_call.1} parent=1 // loop_header
      %s26 = sphi 0, %s30
      %p27 = scmp.ge.s32.totalorder %s26, 4
      %s33 = sphi 0, %s45
      %s34 = sphi 0, %s41
      %s35 = sphi 0, %s33
      %s36 = sphi 0, %s34
      %s37 = sphi 0, %s35
      %s38 = sphi 0, %s36
      %s46 = sphi 0, %s46
      %s48 = sphi 0, %s46
      %s49 = sphi 0, %s48
      %s63 = sphi 0, %s49
      %s67 = sphi 0, %s67
      %s69 = sphi 0, %s67
      %s70 = sphi 0, %s69
      %s84 = sphi 0, %s70
      %s92 = sphi 0, %s94
      %s95 = sphi 0, %s92
      %s96 = sphi 0, %s95
      %s112 = sphi 0, %s96
      %s120 = sphi 0, %s122
      %s123 = sphi 0, %s120
      %s124 = sphi 0, %s123
      %s140 = sphi 0, %s124
      %s148 = sphi 0, %s150
      %s151 = sphi 0, %s148
      %s152 = sphi 0, %s151
      %s168 = sphi 0, %s152
      %s176 = sphi 0, %s178
      %s179 = sphi 0, %s176
      %s180 = sphi 0, %s179
      %s196 = sphi 0, %s180
    $region4: #{tpu_custom_call.1} parent=1 // loop_header_branch
      %29 = sbr.rel (%p27) target = $region8
    $region5: #{tpu_custom_call.1} parent=1 // loop_body
      %s31 = ssub.s32 %s26, 1
      %s32 = ssub.s32 %s26, 2
      %s39 = sadd.s32 1, %s34
      %p40 = scmp.ge.s32.totalorder %s39, 1
      %s41 = scalar_select %p40, 0, %s39
      %s42 = sadd.s32 1, %s33
      %s43 = scalar_select %p40, %s42, %s33
      %p44 = scmp.ge.s32.totalorder %s43, 2
      %s45 = scalar_select %p44, 0, %s43
      %s47 = sadd.s32 %s46, 1
      %p50 = scmp.eq.s32.totalorder %s26, 1
      %p51 = scmp.ne.s32.totalorder %s46, %s48
      %p52 = scmp.eq.s32.totalorder %s26, 0
      %p53 = por %p51, %p52
      %p54 = scmp.ne.s32.totalorder %s46, %s48
      %p55 = scmp.eq.s32.totalorder %s31, 1
      %p56 = por %p54, %p55
      %p57 = scmp.ne.s32.totalorder %s48, %s49
      %p58 = scmp.eq.s32.totalorder %s31, 0
      %p59 = por %p57, %p58
      %p60 = scmp.ne.s32.totalorder %s48, %s49
      %p61 = scmp.eq.s32.totalorder %s32, 1
      %p62 = por %p60, %p61
      %p64 = scmp.ne.s32.totalorder %s49, %s63
      %p65 = scmp.eq.s32.totalorder %s32, 0
      %p66 = por %p64, %p65
      %s68 = sadd.s32 %s67, 1
      %p71 = scmp.eq.s32.totalorder %s26, 1
      %p72 = scmp.ne.s32.totalorder %s67, %s69
      %p73 = scmp.eq.s32.totalorder %s26, 0
      %p74 = por %p72, %p73
      %p75 = scmp.ne.s32.totalorder %s67, %s69
      %p76 = scmp.eq.s32.totalorder %s31, 1
      %p77 = por %p75, %p76
      %p78 = scmp.ne.s32.totalorder %s69, %s70
      %p79 = scmp.eq.s32.totalorder %s31, 0
      %p80 = por %p78, %p79
      %p81 = scmp.ne.s32.totalorder %s69, %s70
      %p82 = scmp.eq.s32.totalorder %s32, 1
      %p83 = por %p81, %p82
      %p85 = scmp.ne.s32.totalorder %s70, %s84
      %p86 = scmp.eq.s32.totalorder %s32, 0
      %p87 = por %p85, %p86
      %s88 = ssub.s32 %s33, %s45
      %s89 = ssub.s32 %s34, %s41
      %s90 = sor.u32 %s88, %s89
      %p91 = scmp.eq.s32.totalorder %s90, 0
      %s93 = sadd.s32 %s92, 1
      %s94 = scalar_select %p91, %s92, %s93
      %p97 = pneg %p91
      %p98 = scmp.eq.s32.totalorder %s26, 1
      %p99 = por %p97, %p98
      %p100 = scmp.ne.s32.totalorder %s92, %s95
      %p101 = scmp.eq.s32.totalorder %s26, 0
      %p102 = por %p100, %p101
      %p103 = scmp.ne.s32.totalorder %s92, %s95
      %p104 = scmp.eq.s32.totalorder %s31, 1
      %p105 = por %p103, %p104
      %p106 = scmp.ne.s32.totalorder %s95, %s96
      %p107 = scmp.eq.s32.totalorder %s31, 0
      %p108 = por %p106, %p107
      %p109 = scmp.ne.s32.totalorder %s95, %s96
      %p110 = scmp.eq.s32.totalorder %s32, 1
      %p111 = por %p109, %p110
      %p113 = scmp.ne.s32.totalorder %s96, %s112
      %p114 = scmp.eq.s32.totalorder %s32, 0
      %p115 = por %p113, %p114
      %s116 = ssub.s32 %s33, %s45
      %s117 = ssub.s32 %s34, %s41
      %s118 = sor.u32 %s116, %s117
      %p119 = scmp.eq.s32.totalorder %s118, 0
      %s121 = sadd.s32 %s120, 1
      %s122 = scalar_select %p119, %s120, %s121
      %p125 = pneg %p119
      %p126 = scmp.eq.s32.totalorder %s26, 1
      %p127 = por %p125, %p126
      %p128 = scmp.ne.s32.totalorder %s120, %s123
      %p129 = scmp.eq.s32.totalorder %s26, 0
      %p130 = por %p128, %p129
      %p131 = scmp.ne.s32.totalorder %s120, %s123
      %p132 = scmp.eq.s32.totalorder %s31, 1
      %p133 = por %p131, %p132
      %p134 = scmp.ne.s32.totalorder %s123, %s124
      %p135 = scmp.eq.s32.totalorder %s31, 0
      %p136 = por %p134, %p135
      %p137 = scmp.ne.s32.totalorder %s123, %s124
      %p138 = scmp.eq.s32.totalorder %s32, 1
      %p139 = por %p137, %p138
      %p141 = scmp.ne.s32.totalorder %s124, %s140
      %p142 = scmp.eq.s32.totalorder %s32, 0
      %p143 = por %p141, %p142
      %s144 = ssub.s32 %s33, %s45
      %s145 = ssub.s32 %s34, %s41
      %s146 = sor.u32 %s144, %s145
      %p147 = scmp.eq.s32.totalorder %s146, 0
      %s149 = sadd.s32 %s148, 1
      %s150 = scalar_select %p147, %s148, %s149
      %p153 = pneg %p147
      %p154 = scmp.eq.s32.totalorder %s26, 1
      %p155 = por %p153, %p154
      %p156 = scmp.ne.s32.totalorder %s148, %s151
      %p157 = scmp.eq.s32.totalorder %s26, 0
      %p158 = por %p156, %p157
      %p159 = scmp.ne.s32.totalorder %s148, %s151
      %p160 = scmp.eq.s32.totalorder %s31, 1
      %p161 = por %p159, %p160
      %p162 = scmp.ne.s32.totalorder %s151, %s152
      %p163 = scmp.eq.s32.totalorder %s31, 0
      %p164 = por %p162, %p163
      %p165 = scmp.ne.s32.totalorder %s151, %s152
      %p166 = scmp.eq.s32.totalorder %s32, 1
      %p167 = por %p165, %p166
      %p169 = scmp.ne.s32.totalorder %s152, %s168
      %p170 = scmp.eq.s32.totalorder %s32, 0
      %p171 = por %p169, %p170
      %s172 = ssub.s32 %s33, %s45
      %s173 = ssub.s32 %s34, %s41
      %s174 = sor.u32 %s172, %s173
      %p175 = scmp.eq.s32.totalorder %s174, 0
      %s177 = sadd.s32 %s176, 1
      %s178 = scalar_select %p175, %s176, %s177
      %p181 = pneg %p175
      %p182 = scmp.eq.s32.totalorder %s26, 1
      %p183 = por %p181, %p182
      %p184 = scmp.ne.s32.totalorder %s176, %s179
      %p185 = scmp.eq.s32.totalorder %s26, 0
      %p186 = por %p184, %p185
      %p187 = scmp.ne.s32.totalorder %s176, %s179
      %p188 = scmp.eq.s32.totalorder %s31, 1
      %p189 = por %p187, %p188
      %p190 = scmp.ne.s32.totalorder %s179, %s180
      %p191 = scmp.eq.s32.totalorder %s31, 0
      %p192 = por %p190, %p191
      %p193 = scmp.ne.s32.totalorder %s179, %s180
      %p194 = scmp.eq.s32.totalorder %s32, 1
      %p195 = por %p193, %p194
      %p197 = scmp.ne.s32.totalorder %s180, %s196
      %p198 = scmp.eq.s32.totalorder %s32, 0
      %p199 = por %p197, %p198
      %p200 = scmp.le.s32.totalorder 1, %s26
      %p201 = scmp.lt.s32.totalorder %s26, 3
      %p202 = pnand %p200, %p201
      %p203 = pneg %p202
      // Predicated region
      $region9: #{tpu_custom_call.1} parent=5 // pred_check
        _
      $region10: #{tpu_custom_call.1} parent=5 // pred_check_branch
        %205 = sbr.rel (%p202) target = $region12
      $region11: #{tpu_custom_call.1} parent=5 // pred_region
        %s206 = ssub.s32 %s26, 1
        // Predicated region
        $region13: #{tpu_custom_call.1} parent=11 // pred_check
          %p207 = pneg %p59
        $region14: #{tpu_custom_call.1} parent=11 // pred_check_branch
          %209 = sbr.rel (%p207) target = $region16
        $region15: #{tpu_custom_call.1} parent=11 // pred_region
          %s211 = ssub.s32 16, 16
          %212 = vsyncadd [#allocation5], %s211
          %215 = dma.hbm_to_smem %s0, 16, [#allocation2], [#allocation5]
        $region16: #{tpu_custom_call.1} parent=11 // pred_fallthru
          _
        // Predicated region
        $region17: #{tpu_custom_call.1} parent=11 // pred_check
          %p216 = pneg %p80
        $region18: #{tpu_custom_call.1} parent=11 // pred_check_branch
          %218 = sbr.rel (%p216) target = $region20
        $region19: #{tpu_custom_call.1} parent=11 // pred_region
          %s220 = ssub.s32 16, 16
          %221 = vsyncadd [#allocation6], %s220
          %s223 = sshll.u32 %s1, 4
          %s224 = int_to_ptr.vmem [resolvable:$true] %s223
          %226 = dma.vmem_to_smem %s224, 16, [#allocation7], [#allocation6]
        $region20: #{tpu_custom_call.1} parent=11 // pred_fallthru
          _
      $region12: #{tpu_custom_call.1} parent=5 // pred_fallthru
        _
      %p227 = scmp.lt.s32.totalorder %s26, 2
      // Predicated region
      $region21: #{tpu_custom_call.1} parent=5 // pred_check
        %p228 = pneg %p227
      $region22: #{tpu_custom_call.1} parent=5 // pred_check_branch
        %230 = sbr.rel (%p228) target = $region24
      $region23: #{tpu_custom_call.1} parent=5 // pred_region
        // Predicated region
        $region25: #{tpu_custom_call.1} parent=23 // pred_check
          %p231 = pneg %p102
        $region26: #{tpu_custom_call.1} parent=23 // pred_check_branch
          %233 = sbr.rel (%p231) target = $region28
        $region27: #{tpu_custom_call.1} parent=23 // pred_region
          %s234 = sand.u32 %s92, 1
          %s235 = scalar_lea.sflag [#allocation3], %s234
          %s236 = sand.u32 %s92, 1
          %s237 = smul.addr %s236, 32
          %s238 = scalar_lea.vmem [#allocation8], %s237
          %s240 = ssub.s32 512, 512
          %241 = vsyncadd %s235, %s240
          %s242 = smul.addr %s33, 4
          %s243 = sadd.s32 %s34, %s242
          %s244 = smul.addr %s243, 128
          %s245 = scalar_lea.hbm %s2, %s244
          %s246 = sshll.u32 %s238, 4
          %s247 = int_to_ptr.vmem [resolvable:$true] %s246
          %252 = dma.hbm_to_vmem [thread:$0]  %s245, 512, %s247, %s235, 128, 128, 8
        $region28: #{tpu_custom_call.1} parent=23 // pred_fallthru
          _
        // Predicated region
        $region29: #{tpu_custom_call.1} parent=23 // pred_check
          %p253 = pneg %p130
        $region30: #{tpu_custom_call.1} parent=23 // pred_check_branch
          %255 = sbr.rel (%p253) target = $region32
        $region31: #{tpu_custom_call.1} parent=23 // pred_region
          %s256 = sand.u32 %s120, 1
          %s257 = scalar_lea.sflag [#allocation10], %s256
          %s258 = sand.u32 %s120, 1
          %s259 = smul.addr %s258, 32
          %s260 = scalar_lea.vmem [#allocation9], %s259
          %s262 = ssub.s32 512, 512
          %263 = vsyncadd %s257, %s262
          %s264 = smul.addr %s33, 4
          %s265 = sadd.s32 %s34, %s264
          %s266 = smul.addr %s265, 128
          %s267 = scalar_lea.hbm %s3, %s266
          %s268 = sshll.u32 %s260, 4
          %s269 = int_to_ptr.vmem [resolvable:$true] %s268
          %274 = dma.hbm_to_vmem [thread:$0]  %s267, 512, %s269, %s257, 128, 128, 8
        $region32: #{tpu_custom_call.1} parent=23 // pred_fallthru
          _
      $region24: #{tpu_custom_call.1} parent=5 // pred_fallthru
        _
      %p275 = scmp.le.s32.totalorder 1, %s26
      %p276 = scmp.lt.s32.totalorder %s26, 3
      %p277 = pnand %p275, %p276
      %p278 = pneg %p277
      // Predicated region
      $region33: #{tpu_custom_call.1} parent=5 // pred_check
        _
      $region34: #{tpu_custom_call.1} parent=5 // pred_check_branch
        %280 = sbr.rel (%p277) target = $region36
      $region35: #{tpu_custom_call.1} parent=5 // pred_region
        %s281 = ssub.s32 %s26, 1
        // Predicated region
        $region37: #{tpu_custom_call.1} parent=35 // pred_check
          %p282 = pneg %p59
        $region38: #{tpu_custom_call.1} parent=35 // pred_check_branch
          %284 = sbr.rel (%p282) target = $region40
        $region39: #{tpu_custom_call.1} parent=35 // pred_region
          %285 = dma.done [#allocation5], 16
        $region40: #{tpu_custom_call.1} parent=35 // pred_fallthru
          _
        // Predicated region
        $region41: #{tpu_custom_call.1} parent=35 // pred_check
          %p286 = pneg %p80
        $region42: #{tpu_custom_call.1} parent=35 // pred_check_branch
          %288 = sbr.rel (%p286) target = $region44
        $region43: #{tpu_custom_call.1} parent=35 // pred_region
          %289 = dma.done [#allocation6], 16
        $region44: #{tpu_custom_call.1} parent=35 // pred_fallthru
          _
        %s290 = sand.u32 %s95, 1
        %s291 = scalar_lea.sflag [#allocation3], %s290
        %s292 = sand.u32 %s95, 1
        %s293 = smul.addr %s292, 32
        %s294 = scalar_lea.vmem [#allocation8], %s293
        // Predicated region
        $region45: #{tpu_custom_call.1} parent=35 // pred_check
          %p295 = pneg %p108
        $region46: #{tpu_custom_call.1} parent=35 // pred_check_branch
          %297 = sbr.rel (%p295) target = $region48
        $region47: #{tpu_custom_call.1} parent=35 // pred_region
          %298 = dma.done %s291, 512
        $region48: #{tpu_custom_call.1} parent=35 // pred_fallthru
          _
        %s299 = sand.u32 %s123, 1
        %s300 = scalar_lea.sflag [#allocation10], %s299
        %s301 = sand.u32 %s123, 1
        %s302 = smul.addr %s301, 32
        %s303 = scalar_lea.vmem [#allocation9], %s302
        // Predicated region
        $region49: #{tpu_custom_call.1} parent=35 // pred_check
          %p304 = pneg %p136
        $region50: #{tpu_custom_call.1} parent=35 // pred_check_branch
          %306 = sbr.rel (%p304) target = $region52
        $region51: #{tpu_custom_call.1} parent=35 // pred_region
          %307 = dma.done %s300, 512
        $region52: #{tpu_custom_call.1} parent=35 // pred_fallthru
          _
        %308 = sfence
        %p309 = pneg %p59
        %p310 = pneg %p56
        %p311 = pneg %p80
        %p312 = pneg %p77
        %s313 = sand.u32 %s95, 1
        %s314 = scalar_lea.sflag [#allocation3], %s313
        %s315 = sand.u32 %s95, 1
        %s316 = smul.addr %s315, 32
        %s317 = scalar_lea.vmem [#allocation8], %s316
        %p318 = pneg %p108
        %p319 = pneg %p105
        %s320 = sand.u32 %s123, 1
        %s321 = scalar_lea.sflag [#allocation10], %s320
        %s322 = sand.u32 %s123, 1
        %s323 = smul.addr %s322, 32
        %s324 = scalar_lea.vmem [#allocation9], %s323
        %p325 = pneg %p136
        %p326 = pneg %p133
        %p327 = pneg %p164
        %p328 = pneg %p161
        %s329 = sand.u32 %s151, 1
        %s330 = scalar_lea.sflag [#allocation4], %s329
        %s331 = sand.u32 %s151, 1
        %s332 = smul.addr %s331, 32
        %s333 = scalar_lea.vmem [#allocation11], %s332
        %p334 = pneg %p192
        %p335 = pneg %p189
        %s336 = sand.u32 %s179, 1
        %s337 = scalar_lea.sflag [#allocation13], %s336
        %s338 = sand.u32 %s179, 1
        %s339 = smul.addr %s338, 32
        %s340 = scalar_lea.vmem [#allocation12], %s339
        %s341 = smul.u32 %s35, 10
        %s342 = sld [smem:[#allocation2 + %s341]]
        %s343 = sadd.s32 %s341, 1
        %s344 = sld [smem:[#allocation2 + %s343]]
        %s345 = sadd.s32 %s341, 2
        %s346 = sld [smem:[#allocation2 + %s345]]
        %s347 = sadd.s32 %s341, 3
        %s348 = sld [smem:[#allocation2 + %s347]]
        %s349 = sadd.s32 %s341, 4
        %s350 = sld [smem:[#allocation2 + %s349]]
        %s351 = sadd.s32 %s341, 5
        %s352 = sld [smem:[#allocation2 + %s351]]
        %s353 = sadd.s32 %s341, 6
        %s354 = sld [smem:[#allocation2 + %s353]]
        %s355 = sadd.s32 %s341, 7
        %s356 = sld [smem:[#allocation2 + %s355]]
        %s357 = sadd.s32 %s341, 8
        %s358 = sld [smem:[#allocation2 + %s357]]
        %s359 = sadd.s32 %s341, 9
        %s360 = sld [smem:[#allocation2 + %s359]]
        %s361 = sld [smem:[#allocation7 + %s35]]
        %v362 = vlaneseq
        %v363 = vshrl.u32 %v362, 7
        %v364 = vlaneseq
        %v365 = vand.u32 %v364, 127
        %s366 = smul.u32 %s36, 1024
        %v367 = vmul.u32 %v363, 128
        %v368 = vstv %s366
        %v369 = vadd.s32 %v368, %v367
        %v370 = vadd.s32 %v369, %v365
        %v371 = vcvt.s32.f32 %v370
        %v372 = vadd.f32 %v371, 0.5
        %v373 = vmul.f32 %v372, 0.0625
        %v374 = vcvt.f32.s32.to.zero.pseudo %v373
        %v375 = vcvt.s32.f32 %v374
        %v376 = vmul.f32 %v375, 16.0
        %v377 = vsub.f32 %v371, %v376
        %v378 = vadd.f32 %v377, 0.5
        %v379 = vmul.f32 %v378, 0.0625
        %v380 = vstv %s350
        %v381 = vsub.f32 %v379, %v380
        %v382 = vand.u32 2147483647, %v381
        %v383 = vstv %s354
        %vm384 = vcmp.ge.f32.partialorder %v382, %v383
        %v385 = vadd.f32 %v375, 0.5
        %v386 = vmul.f32 %v385, 0.0625
        %v387 = vstv %s352
        %v388 = vsub.f32 %v386, %v387
        %v389 = vand.u32 2147483647, %v388
        %v390 = vstv %s356
        %vm391 = vcmp.ge.f32.partialorder %v389, %v390
        %vm392 = vmor %vm384, %vm391
        %v393 = vsel %vm392, 1, 0
        %v394 = vcvt.s32.f32 %v393
        %v395 = vadd.s32 %v370, 1024
        %v396 = vadd.s32 %v370, 2048
        %v397 = vadd.s32 %v370, 3072
        %v398 = vstv %s361
        %v399 = vadd.s32 %v370, %v398
        %v400 = vadd.s32 %v395, %v398
        %v401 = vadd.s32 %v396, %v398
        %v402 = vadd.s32 %v397, %v398
        %v403 = vld [vmem:[%s294] sm:$0xff]
        %v404 = vld [vmem:[%s294 + $0x8] sm:$0xff]
        %v405 = vld [vmem:[%s294 + $0x10] sm:$0xff]
        %v406 = vld [vmem:[%s294 + $0x18] sm:$0xff]
        %v407 = vstv %s342
        %v408 = vadd.f32 %v403, %v407
        %v409 = vadd.f32 %v404, %v407
        %v410 = vadd.f32 %v405, %v407
        %v411 = vadd.f32 %v406, %v407
        %s412 = sadd.f32 %s358, %s342
        %v413 = vstv %s412
        %v414 = vsub.f32 %v408, %v413
        %v415 = vsub.f32 %v409, %v413
        %v416 = vsub.f32 %v410, %v413
        %v417 = vsub.f32 %v411, %v413
        %v418 = vstv %s344
        %v419 = vmul.f32 %v414, %v418
        %v420 = vmul.f32 %v415, %v418
        %v421 = vmul.f32 %v416, %v418
        %v422 = vmul.f32 %v417, %v418
        %v423 = vadd.f32 %v419, %v413
        %v424 = vadd.f32 %v420, %v413
        %v425 = vadd.f32 %v421, %v413
        %v426 = vadd.f32 %v422, %v413
        %v427 = vadd.f32 %v423, %v424
        %v428 = vadd.f32 %v427, %v425
        %v429 = vadd.f32 %v428, %v426
        %v430 = vrcp.pop 4.0
        %v431 = vmul.f32 %v429, %v430
        %v432 = vsub.f32 %v423, %v431
        %v433 = vsub.f32 %v424, %v431
        %v434 = vsub.f32 %v425, %v431
        %v435 = vsub.f32 %v426, %v431
        %v436 = vstv %s346
        %v437 = vmul.f32 %v432, %v436
        %v438 = vmul.f32 %v433, %v436
        %v439 = vmul.f32 %v434, %v436
        %v440 = vmul.f32 %v435, %v436
        %v441 = vadd.f32 %v437, %v431
        %v442 = vadd.f32 %v438, %v431
        %v443 = vadd.f32 %v439, %v431
        %v444 = vadd.f32 %v440, %v431
        %v445 = vmul.f32 %v441, %v394
        %v446 = vmul.f32 %v442, %v394
        %v447 = vmul.f32 %v443, %v394
        %v448 = vmul.f32 %v444, %v394
        %449 = vst [vmem:[%s333] sm:$0xff] %v445
        %450 = vst [vmem:[%s333 + $0x8] sm:$0xff] %v446
        %451 = vst [vmem:[%s333 + $0x10] sm:$0xff] %v447
        %452 = vst [vmem:[%s333 + $0x18] sm:$0xff] %v448
        %p453 = scmp.gt.f32.partialorder %s348, 0.0
        // Predicated region
        $region53: #{tpu_custom_call.1} parent=35 // pred_check
          %p454 = pneg %p453
        $region54: #{tpu_custom_call.1} parent=35 // pred_check_branch
          %456 = sbr.rel (%p454) target = $region56
        $region55: #{tpu_custom_call.1} parent=35 // pred_region
          %v457 = vadd.s32 %v399, 1540483477
          %v458 = vadd.s32 %v400, 1540483477
          %v459 = vadd.s32 %v401, 1540483477
          %v460 = vadd.s32 %v402, 1540483477
          %v461 = vshra.s32 %v457, 16
          %v462 = vshra.s32 %v458, 16
          %v463 = vshra.s32 %v459, 16
          %v464 = vshra.s32 %v460, 16
          %v465 = vand.u32 %v461, 65535
          %v466 = vand.u32 %v462, 65535
          %v467 = vand.u32 %v463, 65535
          %v468 = vand.u32 %v464, 65535
          %v469 = vxor.u32 %v457, %v465
          %v470 = vxor.u32 %v458, %v466
          %v471 = vxor.u32 %v459, %v467
          %v472 = vxor.u32 %v460, %v468
          %v473 = vmul.u32 %v469, 2246822507
          %v474 = vmul.u32 %v470, 2246822507
          %v475 = vmul.u32 %v471, 2246822507
          %v476 = vmul.u32 %v472, 2246822507
          %v477 = vshra.s32 %v473, 13
          %v478 = vshra.s32 %v474, 13
          %v479 = vshra.s32 %v475, 13
          %v480 = vshra.s32 %v476, 13
          %v481 = vand.u32 %v477, 524287
          %v482 = vand.u32 %v478, 524287
          %v483 = vand.u32 %v479, 524287
          %v484 = vand.u32 %v480, 524287
          %v485 = vxor.u32 %v473, %v481
          %v486 = vxor.u32 %v474, %v482
          %v487 = vxor.u32 %v475, %v483
          %v488 = vxor.u32 %v476, %v484
          %v489 = vmul.u32 %v485, 3266489909
          %v490 = vmul.u32 %v486, 3266489909
          %v491 = vmul.u32 %v487, 3266489909
          %v492 = vmul.u32 %v488, 3266489909
          %v493 = vshra.s32 %v489, 16
          %v494 = vshra.s32 %v490, 16
          %v495 = vshra.s32 %v491, 16
          %v496 = vshra.s32 %v492, 16
          %v497 = vand.u32 %v493, 65535
          %v498 = vand.u32 %v494, 65535
          %v499 = vand.u32 %v495, 65535
          %v500 = vand.u32 %v496, 65535
          %v501 = vxor.u32 %v489, %v497
          %v502 = vxor.u32 %v490, %v498
          %v503 = vxor.u32 %v491, %v499
          %v504 = vxor.u32 %v492, %v500
          %v505 = vand.u32 %v501, 65535
          %v506 = vand.u32 %v502, 65535
          %v507 = vand.u32 %v503, 65535
          %v508 = vand.u32 %v504, 65535
          %v509 = vcvt.s32.f32 %v505
          %v510 = vcvt.s32.f32 %v506
          %v511 = vcvt.s32.f32 %v507
          %v512 = vcvt.s32.f32 %v508
          %v513 = vshra.s32 %v501, 16
          %v514 = vshra.s32 %v502, 16
          %v515 = vshra.s32 %v503, 16
          %v516 = vshra.s32 %v504, 16
          %v517 = vand.u32 %v513, 65535
          %v518 = vand.u32 %v514, 65535
          %v519 = vand.u32 %v515, 65535
          %v520 = vand.u32 %v516, 65535
          %v521 = vcvt.s32.f32 %v517
          %v522 = vcvt.s32.f32 %v518
          %v523 = vcvt.s32.f32 %v519
          %v524 = vcvt.s32.f32 %v520
          %v525 = vadd.f32 %v509, %v521
          %v526 = vadd.f32 %v510, %v522
          %v527 = vadd.f32 %v511, %v523
          %v528 = vadd.f32 %v512, %v524
          %v529 = vmul.f32 %v525, 1.5258789e-05
          %v530 = vmul.f32 %v526, 1.5258789e-05
          %v531 = vmul.f32 %v527, 1.5258789e-05
          %v532 = vmul.f32 %v528, 1.5258789e-05
          %v533 = vadd.s32 %v399, 2554387700
          %v534 = vadd.s32 %v400, 2554387700
          %v535 = vadd.s32 %v401, 2554387700
          %v536 = vadd.s32 %v402, 2554387700
          %v537 = vshra.s32 %v533, 16
          %v538 = vshra.s32 %v534, 16
          %v539 = vshra.s32 %v535, 16
          %v540 = vshra.s32 %v536, 16
          %v541 = vand.u32 %v537, 65535
          %v542 = vand.u32 %v538, 65535
          %v543 = vand.u32 %v539, 65535
          %v544 = vand.u32 %v540, 65535
          %v545 = vxor.u32 %v533, %v541
          %v546 = vxor.u32 %v534, %v542
          %v547 = vxor.u32 %v535, %v543
          %v548 = vxor.u32 %v536, %v544
          %v549 = vmul.u32 %v545, 2246822507
          %v550 = vmul.u32 %v546, 2246822507
          %v551 = vmul.u32 %v547, 2246822507
          %v552 = vmul.u32 %v548, 2246822507
          %v553 = vshra.s32 %v549, 13
          %v554 = vshra.s32 %v550, 13
          %v555 = vshra.s32 %v551, 13
          %v556 = vshra.s32 %v552, 13
          %v557 = vand.u32 %v553, 524287
          %v558 = vand.u32 %v554, 524287
          %v559 = vand.u32 %v555, 524287
          %v560 = vand.u32 %v556, 524287
          %v561 = vxor.u32 %v549, %v557
          %v562 = vxor.u32 %v550, %v558
          %v563 = vxor.u32 %v551, %v559
          %v564 = vxor.u32 %v552, %v560
          %v565 = vmul.u32 %v561, 3266489909
          %v566 = vmul.u32 %v562, 3266489909
          %v567 = vmul.u32 %v563, 3266489909
          %v568 = vmul.u32 %v564, 3266489909
          %v569 = vshra.s32 %v565, 16
          %v570 = vshra.s32 %v566, 16
          %v571 = vshra.s32 %v567, 16
          %v572 = vshra.s32 %v568, 16
          %v573 = vand.u32 %v569, 65535
          %v574 = vand.u32 %v570, 65535
          %v575 = vand.u32 %v571, 65535
          %v576 = vand.u32 %v572, 65535
          %v577 = vxor.u32 %v565, %v573
          %v578 = vxor.u32 %v566, %v574
          %v579 = vxor.u32 %v567, %v575
          %v580 = vxor.u32 %v568, %v576
          %v581 = vand.u32 %v577, 65535
          %v582 = vand.u32 %v578, 65535
          %v583 = vand.u32 %v579, 65535
          %v584 = vand.u32 %v580, 65535
          %v585 = vcvt.s32.f32 %v581
          %v586 = vcvt.s32.f32 %v582
          %v587 = vcvt.s32.f32 %v583
          %v588 = vcvt.s32.f32 %v584
          %v589 = vshra.s32 %v577, 16
          %v590 = vshra.s32 %v578, 16
          %v591 = vshra.s32 %v579, 16
          %v592 = vshra.s32 %v580, 16
          %v593 = vand.u32 %v589, 65535
          %v594 = vand.u32 %v590, 65535
          %v595 = vand.u32 %v591, 65535
          %v596 = vand.u32 %v592, 65535
          %v597 = vcvt.s32.f32 %v593
          %v598 = vcvt.s32.f32 %v594
          %v599 = vcvt.s32.f32 %v595
          %v600 = vcvt.s32.f32 %v596
          %v601 = vadd.f32 %v585, %v597
          %v602 = vadd.f32 %v586, %v598
          %v603 = vadd.f32 %v587, %v599
          %v604 = vadd.f32 %v588, %v600
          %v605 = vmul.f32 %v601, 1.5258789e-05
          %v606 = vmul.f32 %v602, 1.5258789e-05
          %v607 = vmul.f32 %v603, 1.5258789e-05
          %v608 = vmul.f32 %v604, 1.5258789e-05
          %v609 = vadd.f32 %v529, %v605
          %v610 = vadd.f32 %v530, %v606
          %v611 = vadd.f32 %v531, %v607
          %v612 = vadd.f32 %v532, %v608
          %v613 = vadd.s32 %v399, 3568291923
          %v614 = vadd.s32 %v400, 3568291923
          %v615 = vadd.s32 %v401, 3568291923
          %v616 = vadd.s32 %v402, 3568291923
          %v617 = vshra.s32 %v613, 16
          %v618 = vshra.s32 %v614, 16
          %v619 = vshra.s32 %v615, 16
          %v620 = vshra.s32 %v616, 16
          %v621 = vand.u32 %v617, 65535
          %v622 = vand.u32 %v618, 65535
          %v623 = vand.u32 %v619, 65535
          %v624 = vand.u32 %v620, 65535
          %v625 = vxor.u32 %v613, %v621
          %v626 = vxor.u32 %v614, %v622
          %v627 = vxor.u32 %v615, %v623
          %v628 = vxor.u32 %v616, %v624
          %v629 = vmul.u32 %v625, 2246822507
          %v630 = vmul.u32 %v626, 2246822507
          %v631 = vmul.u32 %v627, 2246822507
          %v632 = vmul.u32 %v628, 2246822507
          %v633 = vshra.s32 %v629, 13
          %v634 = vshra.s32 %v630, 13
          %v635 = vshra.s32 %v631, 13
          %v636 = vshra.s32 %v632, 13
          %v637 = vand.u32 %v633, 524287
          %v638 = vand.u32 %v634, 524287
          %v639 = vand.u32 %v635, 524287
          %v640 = vand.u32 %v636, 524287
          %v641 = vxor.u32 %v629, %v637
          %v642 = vxor.u32 %v630, %v638
          %v643 = vxor.u32 %v631, %v639
          %v644 = vxor.u32 %v632, %v640
          %v645 = vmul.u32 %v641, 3266489909
          %v646 = vmul.u32 %v642, 3266489909
          %v647 = vmul.u32 %v643, 3266489909
          %v648 = vmul.u32 %v644, 3266489909
          %v649 = vshra.s32 %v645, 16
          %v650 = vshra.s32 %v646, 16
          %v651 = vshra.s32 %v647, 16
          %v652 = vshra.s32 %v648, 16
          %v653 = vand.u32 %v649, 65535
          %v654 = vand.u32 %v650, 65535
          %v655 = vand.u32 %v651, 65535
          %v656 = vand.u32 %v652, 65535
          %v657 = vxor.u32 %v645, %v653
          %v658 = vxor.u32 %v646, %v654
          %v659 = vxor.u32 %v647, %v655
          %v660 = vxor.u32 %v648, %v656
          %v661 = vand.u32 %v657, 65535
          %v662 = vand.u32 %v658, 65535
          %v663 = vand.u32 %v659, 65535
          %v664 = vand.u32 %v660, 65535
          %v665 = vcvt.s32.f32 %v661
          %v666 = vcvt.s32.f32 %v662
          %v667 = vcvt.s32.f32 %v663
          %v668 = vcvt.s32.f32 %v664
          %v669 = vshra.s32 %v657, 16
          %v670 = vshra.s32 %v658, 16
          %v671 = vshra.s32 %v659, 16
          %v672 = vshra.s32 %v660, 16
          %v673 = vand.u32 %v669, 65535
          %v674 = vand.u32 %v670, 65535
          %v675 = vand.u32 %v671, 65535
          %v676 = vand.u32 %v672, 65535
          %v677 = vcvt.s32.f32 %v673
          %v678 = vcvt.s32.f32 %v674
          %v679 = vcvt.s32.f32 %v675
          %v680 = vcvt.s32.f32 %v676
          %v681 = vadd.f32 %v665, %v677
          %v682 = vadd.f32 %v666, %v678
          %v683 = vadd.f32 %v667, %v679
          %v684 = vadd.f32 %v668, %v680
          %v685 = vmul.f32 %v681, 1.5258789e-05
          %v686 = vmul.f32 %v682, 1.5258789e-05
          %v687 = vmul.f32 %v683, 1.5258789e-05
          %v688 = vmul.f32 %v684, 1.5258789e-05
          %v689 = vadd.f32 %v609, %v685
          %v690 = vadd.f32 %v610, %v686
          %v691 = vadd.f32 %v611, %v687
          %v692 = vadd.f32 %v612, %v688
          %v693 = vsub.f32 %v689, 3.0
          %v694 = vsub.f32 %v690, 3.0
          %v695 = vsub.f32 %v691, 3.0
          %v696 = vsub.f32 %v692, 3.0
          %v697 = vmul.f32 %v693, 1.4142135
          %v698 = vmul.f32 %v694, 1.4142135
          %v699 = vmul.f32 %v695, 1.4142135
          %v700 = vmul.f32 %v696, 1.4142135
          %v701 = vld [vmem:[%s333] sm:$0xff]
          %v702 = vld [vmem:[%s333 + $0x8] sm:$0xff]
          %v703 = vld [vmem:[%s333 + $0x10] sm:$0xff]
          %v704 = vld [vmem:[%s333 + $0x18] sm:$0xff]
          %v705 = vstv %s348
          %v706 = vmul.f32 %v697, %v705
          %v707 = vmul.f32 %v698, %v705
          %v708 = vmul.f32 %v699, %v705
          %v709 = vmul.f32 %v700, %v705
          %v710 = vmul.f32 %v706, %v394
          %v711 = vmul.f32 %v707, %v394
          %v712 = vmul.f32 %v708, %v394
          %v713 = vmul.f32 %v709, %v394
          %v714 = vadd.f32 %v701, %v710
          %v715 = vadd.f32 %v702, %v711
          %v716 = vadd.f32 %v703, %v712
          %v717 = vadd.f32 %v704, %v713
          %718 = vst [vmem:[%s333] sm:$0xff] %v714
          %719 = vst [vmem:[%s333 + $0x8] sm:$0xff] %v715
          %720 = vst [vmem:[%s333 + $0x10] sm:$0xff] %v716
          %721 = vst [vmem:[%s333 + $0x18] sm:$0xff] %v717
        $region56: #{tpu_custom_call.1} parent=35 // pred_fallthru
          _
        %v722 = vld [vmem:[%s303] sm:$0xff]
        %v723 = vld [vmem:[%s303 + $0x8] sm:$0xff]
        %v724 = vld [vmem:[%s303 + $0x10] sm:$0xff]
        %v725 = vld [vmem:[%s303 + $0x18] sm:$0xff]
        %v726 = vadd.f32 %v722, %v407
        %v727 = vadd.f32 %v723, %v407
        %v728 = vadd.f32 %v724, %v407
        %v729 = vadd.f32 %v725, %v407
        %s730 = sadd.f32 %s360, %s342
        %v731 = vstv %s730
        %v732 = vsub.f32 %v726, %v731
        %v733 = vsub.f32 %v727, %v731
        %v734 = vsub.f32 %v728, %v731
        %v735 = vsub.f32 %v729, %v731
        %v736 = vmul.f32 %v732, %v418
        %v737 = vmul.f32 %v733, %v418
        %v738 = vmul.f32 %v734, %v418
        %v739 = vmul.f32 %v735, %v418
        %v740 = vadd.f32 %v736, %v731
        %v741 = vadd.f32 %v737, %v731
        %v742 = vadd.f32 %v738, %v731
        %v743 = vadd.f32 %v739, %v731
        %v744 = vadd.f32 %v740, %v741
        %v745 = vadd.f32 %v744, %v742
        %v746 = vadd.f32 %v745, %v743
        %v747 = vmul.f32 %v746, %v430
        %v748 = vsub.f32 %v740, %v747
        %v749 = vsub.f32 %v741, %v747
        %v750 = vsub.f32 %v742, %v747
        %v751 = vsub.f32 %v743, %v747
        %v752 = vmul.f32 %v748, %v436
        %v753 = vmul.f32 %v749, %v436
        %v754 = vmul.f32 %v750, %v436
        %v755 = vmul.f32 %v751, %v436
        %v756 = vadd.f32 %v752, %v747
        %v757 = vadd.f32 %v753, %v747
        %v758 = vadd.f32 %v754, %v747
        %v759 = vadd.f32 %v755, %v747
        %v760 = vmul.f32 %v756, %v394
        %v761 = vmul.f32 %v757, %v394
        %v762 = vmul.f32 %v758, %v394
        %v763 = vmul.f32 %v759, %v394
        %764 = vst [vmem:[%s340] sm:$0xff] %v760
        %765 = vst [vmem:[%s340 + $0x8] sm:$0xff] %v761
        %766 = vst [vmem:[%s340 + $0x10] sm:$0xff] %v762
        %767 = vst [vmem:[%s340 + $0x18] sm:$0xff] %v763
        // Predicated region
        $region57: #{tpu_custom_call.1} parent=35 // pred_check
          %p768 = pneg %p453
        $region58: #{tpu_custom_call.1} parent=35 // pred_check_branch
          %770 = sbr.rel (%p768) target = $region60
        $region59: #{tpu_custom_call.1} parent=35 // pred_region
          %v771 = vadd.s32 %v399, 668265263
          %v772 = vadd.s32 %v400, 668265263
          %v773 = vadd.s32 %v401, 668265263
          %v774 = vadd.s32 %v402, 668265263
          %v775 = vshra.s32 %v771, 16
          %v776 = vshra.s32 %v772, 16
          %v777 = vshra.s32 %v773, 16
          %v778 = vshra.s32 %v774, 16
          %v779 = vand.u32 %v775, 65535
          %v780 = vand.u32 %v776, 65535
          %v781 = vand.u32 %v777, 65535
          %v782 = vand.u32 %v778, 65535
          %v783 = vxor.u32 %v771, %v779
          %v784 = vxor.u32 %v772, %v780
          %v785 = vxor.u32 %v773, %v781
          %v786 = vxor.u32 %v774, %v782
          %v787 = vmul.u32 %v783, 2246822507
          %v788 = vmul.u32 %v784, 2246822507
          %v789 = vmul.u32 %v785, 2246822507
          %v790 = vmul.u32 %v786, 2246822507
          %v791 = vshra.s32 %v787, 13
          %v792 = vshra.s32 %v788, 13
          %v793 = vshra.s32 %v789, 13
          %v794 = vshra.s32 %v790, 13
          %v795 = vand.u32 %v791, 524287
          %v796 = vand.u32 %v792, 524287
          %v797 = vand.u32 %v793, 524287
          %v798 = vand.u32 %v794, 524287
          %v799 = vxor.u32 %v787, %v795
          %v800 = vxor.u32 %v788, %v796
          %v801 = vxor.u32 %v789, %v797
          %v802 = vxor.u32 %v790, %v798
          %v803 = vmul.u32 %v799, 3266489909
          %v804 = vmul.u32 %v800, 3266489909
          %v805 = vmul.u32 %v801, 3266489909
          %v806 = vmul.u32 %v802, 3266489909
          %v807 = vshra.s32 %v803, 16
          %v808 = vshra.s32 %v804, 16
          %v809 = vshra.s32 %v805, 16
          %v810 = vshra.s32 %v806, 16
          %v811 = vand.u32 %v807, 65535
          %v812 = vand.u32 %v808, 65535
          %v813 = vand.u32 %v809, 65535
          %v814 = vand.u32 %v810, 65535
          %v815 = vxor.u32 %v803, %v811
          %v816 = vxor.u32 %v804, %v812
          %v817 = vxor.u32 %v805, %v813
          %v818 = vxor.u32 %v806, %v814
          %v819 = vand.u32 %v815, 65535
          %v820 = vand.u32 %v816, 65535
          %v821 = vand.u32 %v817, 65535
          %v822 = vand.u32 %v818, 65535
          %v823 = vcvt.s32.f32 %v819
          %v824 = vcvt.s32.f32 %v820
          %v825 = vcvt.s32.f32 %v821
          %v826 = vcvt.s32.f32 %v822
          %v827 = vshra.s32 %v815, 16
          %v828 = vshra.s32 %v816, 16
          %v829 = vshra.s32 %v817, 16
          %v830 = vshra.s32 %v818, 16
          %v831 = vand.u32 %v827, 65535
          %v832 = vand.u32 %v828, 65535
          %v833 = vand.u32 %v829, 65535
          %v834 = vand.u32 %v830, 65535
          %v835 = vcvt.s32.f32 %v831
          %v836 = vcvt.s32.f32 %v832
          %v837 = vcvt.s32.f32 %v833
          %v838 = vcvt.s32.f32 %v834
          %v839 = vadd.f32 %v823, %v835
          %v840 = vadd.f32 %v824, %v836
          %v841 = vadd.f32 %v825, %v837
          %v842 = vadd.f32 %v826, %v838
          %v843 = vmul.f32 %v839, 1.5258789e-05
          %v844 = vmul.f32 %v840, 1.5258789e-05
          %v845 = vmul.f32 %v841, 1.5258789e-05
          %v846 = vmul.f32 %v842, 1.5258789e-05
          %v847 = vadd.s32 %v399, 1682169486
          %v848 = vadd.s32 %v400, 1682169486
          %v849 = vadd.s32 %v401, 1682169486
          %v850 = vadd.s32 %v402, 1682169486
          %v851 = vshra.s32 %v847, 16
          %v852 = vshra.s32 %v848, 16
          %v853 = vshra.s32 %v849, 16
          %v854 = vshra.s32 %v850, 16
          %v855 = vand.u32 %v851, 65535
          %v856 = vand.u32 %v852, 65535
          %v857 = vand.u32 %v853, 65535
          %v858 = vand.u32 %v854, 65535
          %v859 = vxor.u32 %v847, %v855
          %v860 = vxor.u32 %v848, %v856
          %v861 = vxor.u32 %v849, %v857
          %v862 = vxor.u32 %v850, %v858
          %v863 = vmul.u32 %v859, 2246822507
          %v864 = vmul.u32 %v860, 2246822507
          %v865 = vmul.u32 %v861, 2246822507
          %v866 = vmul.u32 %v862, 2246822507
          %v867 = vshra.s32 %v863, 13
          %v868 = vshra.s32 %v864, 13
          %v869 = vshra.s32 %v865, 13
          %v870 = vshra.s32 %v866, 13
          %v871 = vand.u32 %v867, 524287
          %v872 = vand.u32 %v868, 524287
          %v873 = vand.u32 %v869, 524287
          %v874 = vand.u32 %v870, 524287
          %v875 = vxor.u32 %v863, %v871
          %v876 = vxor.u32 %v864, %v872
          %v877 = vxor.u32 %v865, %v873
          %v878 = vxor.u32 %v866, %v874
          %v879 = vmul.u32 %v875, 3266489909
          %v880 = vmul.u32 %v876, 3266489909
          %v881 = vmul.u32 %v877, 3266489909
          %v882 = vmul.u32 %v878, 3266489909
          %v883 = vshra.s32 %v879, 16
          %v884 = vshra.s32 %v880, 16
          %v885 = vshra.s32 %v881, 16
          %v886 = vshra.s32 %v882, 16
          %v887 = vand.u32 %v883, 65535
          %v888 = vand.u32 %v884, 65535
          %v889 = vand.u32 %v885, 65535
          %v890 = vand.u32 %v886, 65535
          %v891 = vxor.u32 %v879, %v887
          %v892 = vxor.u32 %v880, %v888
          %v893 = vxor.u32 %v881, %v889
          %v894 = vxor.u32 %v882, %v890
          %v895 = vand.u32 %v891, 65535
          %v896 = vand.u32 %v892, 65535
          %v897 = vand.u32 %v893, 65535
          %v898 = vand.u32 %v894, 65535
          %v899 = vcvt.s32.f32 %v895
          %v900 = vcvt.s32.f32 %v896
          %v901 = vcvt.s32.f32 %v897
          %v902 = vcvt.s32.f32 %v898
          %v903 = vshra.s32 %v891, 16
          %v904 = vshra.s32 %v892, 16
          %v905 = vshra.s32 %v893, 16
          %v906 = vshra.s32 %v894, 16
          %v907 = vand.u32 %v903, 65535
          %v908 = vand.u32 %v904, 65535
          %v909 = vand.u32 %v905, 65535
          %v910 = vand.u32 %v906, 65535
          %v911 = vcvt.s32.f32 %v907
          %v912 = vcvt.s32.f32 %v908
          %v913 = vcvt.s32.f32 %v909
          %v914 = vcvt.s32.f32 %v910
          %v915 = vadd.f32 %v899, %v911
          %v916 = vadd.f32 %v900, %v912
          %v917 = vadd.f32 %v901, %v913
          %v918 = vadd.f32 %v902, %v914
          %v919 = vmul.f32 %v915, 1.5258789e-05
          %v920 = vmul.f32 %v916, 1.5258789e-05
          %v921 = vmul.f32 %v917, 1.5258789e-05
          %v922 = vmul.f32 %v918, 1.5258789e-05
          %v923 = vadd.f32 %v843, %v919
          %v924 = vadd.f32 %v844, %v920
          %v925 = vadd.f32 %v845, %v921
          %v926 = vadd.f32 %v846, %v922
          %v927 = vadd.s32 %v399, 2696073709
          %v928 = vadd.s32 %v400, 2696073709
          %v929 = vadd.s32 %v401, 2696073709
          %v930 = vadd.s32 %v402, 2696073709
          %v931 = vshra.s32 %v927, 16
          %v932 = vshra.s32 %v928, 16
          %v933 = vshra.s32 %v929, 16
          %v934 = vshra.s32 %v930, 16
          %v935 = vand.u32 %v931, 65535
          %v936 = vand.u32 %v932, 65535
          %v937 = vand.u32 %v933, 65535
          %v938 = vand.u32 %v934, 65535
          %v939 = vxor.u32 %v927, %v935
          %v940 = vxor.u32 %v928, %v936
          %v941 = vxor.u32 %v929, %v937
          %v942 = vxor.u32 %v930, %v938
          %v943 = vmul.u32 %v939, 2246822507
          %v944 = vmul.u32 %v940, 2246822507
          %v945 = vmul.u32 %v941, 2246822507
          %v946 = vmul.u32 %v942, 2246822507
          %v947 = vshra.s32 %v943, 13
          %v948 = vshra.s32 %v944, 13
          %v949 = vshra.s32 %v945, 13
          %v950 = vshra.s32 %v946, 13
          %v951 = vand.u32 %v947, 524287
          %v952 = vand.u32 %v948, 524287
          %v953 = vand.u32 %v949, 524287
          %v954 = vand.u32 %v950, 524287
          %v955 = vxor.u32 %v943, %v951
          %v956 = vxor.u32 %v944, %v952
          %v957 = vxor.u32 %v945, %v953
          %v958 = vxor.u32 %v946, %v954
          %v959 = vmul.u32 %v955, 3266489909
          %v960 = vmul.u32 %v956, 3266489909
          %v961 = vmul.u32 %v957, 3266489909
          %v962 = vmul.u32 %v958, 3266489909
          %v963 = vshra.s32 %v959, 16
          %v964 = vshra.s32 %v960, 16
          %v965 = vshra.s32 %v961, 16
          %v966 = vshra.s32 %v962, 16
          %v967 = vand.u32 %v963, 65535
          %v968 = vand.u32 %v964, 65535
          %v969 = vand.u32 %v965, 65535
          %v970 = vand.u32 %v966, 65535
          %v971 = vxor.u32 %v959, %v967
          %v972 = vxor.u32 %v960, %v968
          %v973 = vxor.u32 %v961, %v969
          %v974 = vxor.u32 %v962, %v970
          %v975 = vand.u32 %v971, 65535
          %v976 = vand.u32 %v972, 65535
          %v977 = vand.u32 %v973, 65535
          %v978 = vand.u32 %v974, 65535
          %v979 = vcvt.s32.f32 %v975
          %v980 = vcvt.s32.f32 %v976
          %v981 = vcvt.s32.f32 %v977
          %v982 = vcvt.s32.f32 %v978
          %v983 = vshra.s32 %v971, 16
          %v984 = vshra.s32 %v972, 16
          %v985 = vshra.s32 %v973, 16
          %v986 = vshra.s32 %v974, 16
          %v987 = vand.u32 %v983, 65535
          %v988 = vand.u32 %v984, 65535
          %v989 = vand.u32 %v985, 65535
          %v990 = vand.u32 %v986, 65535
          %v991 = vcvt.s32.f32 %v987
          %v992 = vcvt.s32.f32 %v988
          %v993 = vcvt.s32.f32 %v989
          %v994 = vcvt.s32.f32 %v990
          %v995 = vadd.f32 %v979, %v991
          %v996 = vadd.f32 %v980, %v992
          %v997 = vadd.f32 %v981, %v993
          %v998 = vadd.f32 %v982, %v994
          %v999 = vmul.f32 %v995, 1.5258789e-05
          %v1000 = vmul.f32 %v996, 1.5258789e-05
          %v1001 = vmul.f32 %v997, 1.5258789e-05
          %v1002 = vmul.f32 %v998, 1.5258789e-05
          %v1003 = vadd.f32 %v923, %v999
          %v1004 = vadd.f32 %v924, %v1000
          %v1005 = vadd.f32 %v925, %v1001
          %v1006 = vadd.f32 %v926, %v1002
          %v1007 = vsub.f32 %v1003, 3.0
          %v1008 = vsub.f32 %v1004, 3.0
          %v1009 = vsub.f32 %v1005, 3.0
          %v1010 = vsub.f32 %v1006, 3.0
          %v1011 = vmul.f32 %v1007, 1.4142135
          %v1012 = vmul.f32 %v1008, 1.4142135
          %v1013 = vmul.f32 %v1009, 1.4142135
          %v1014 = vmul.f32 %v1010, 1.4142135
          %v1015 = vld [vmem:[%s340] sm:$0xff]
          %v1016 = vld [vmem:[%s340 + $0x8] sm:$0xff]
          %v1017 = vld [vmem:[%s340 + $0x10] sm:$0xff]
          %v1018 = vld [vmem:[%s340 + $0x18] sm:$0xff]
          %v1019 = vstv %s348
          %v1020 = vmul.f32 %v1011, %v1019
          %v1021 = vmul.f32 %v1012, %v1019
          %v1022 = vmul.f32 %v1013, %v1019
          %v1023 = vmul.f32 %v1014, %v1019
          %v1024 = vmul.f32 %v1020, %v394
          %v1025 = vmul.f32 %v1021, %v394
          %v1026 = vmul.f32 %v1022, %v394
          %v1027 = vmul.f32 %v1023, %v394
          %v1028 = vadd.f32 %v1015, %v1024
          %v1029 = vadd.f32 %v1016, %v1025
          %v1030 = vadd.f32 %v1017, %v1026
          %v1031 = vadd.f32 %v1018, %v1027
          %1032 = vst [vmem:[%s340] sm:$0xff] %v1028
          %1033 = vst [vmem:[%s340 + $0x8] sm:$0xff] %v1029
          %1034 = vst [vmem:[%s340 + $0x10] sm:$0xff] %v1030
          %1035 = vst [vmem:[%s340 + $0x18] sm:$0xff] %v1031
        $region60: #{tpu_custom_call.1} parent=35 // pred_fallthru
          _
        %s1036 = sand.u32 %s151, 1
        %s1037 = scalar_lea.sflag [#allocation4], %s1036
        %s1038 = sand.u32 %s151, 1
        %s1039 = smul.addr %s1038, 32
        %s1040 = scalar_lea.vmem [#allocation11], %s1039
        %s1041 = sand.u32 %s179, 1
        %s1042 = scalar_lea.sflag [#allocation13], %s1041
        %s1043 = sand.u32 %s179, 1
        %s1044 = smul.addr %s1043, 32
        %s1045 = scalar_lea.vmem [#allocation12], %s1044
        // Predicated region
        $region61: #{tpu_custom_call.1} parent=35 // pred_check
          %p1046 = pneg %p161
        $region62: #{tpu_custom_call.1} parent=35 // pred_check_branch
          %1048 = sbr.rel (%p1046) target = $region64
        $region63: #{tpu_custom_call.1} parent=35 // pred_region
          %s1050 = ssub.s32 512, 512
          %1051 = vsyncadd %s1037, %s1050
          %s1052 = smul.addr %s35, 4
          %s1053 = sadd.s32 %s36, %s1052
          %s1054 = smul.addr %s1053, 128
          %s1055 = scalar_lea.hbm %s4, %s1054
          %s1056 = sshll.u32 %s1040, 4
          %s1057 = int_to_ptr.vmem [resolvable:$true] %s1056
          %1062 = dma.vmem_to_hbm [thread:$0]  %s1057, 512, %s1055, %s1037, 128, 128, 8
        $region64: #{tpu_custom_call.1} parent=35 // pred_fallthru
          _
        // Predicated region
        $region65: #{tpu_custom_call.1} parent=35 // pred_check
          %p1063 = pneg %p189
        $region66: #{tpu_custom_call.1} parent=35 // pred_check_branch
          %1065 = sbr.rel (%p1063) target = $region68
        $region67: #{tpu_custom_call.1} parent=35 // pred_region
          %s1067 = ssub.s32 512, 512
          %1068 = vsyncadd %s1042, %s1067
          %s1069 = smul.addr %s35, 4
          %s1070 = sadd.s32 %s36, %s1069
          %s1071 = smul.addr %s1070, 128
          %s1072 = scalar_lea.hbm %s5, %s1071
          %s1073 = sshll.u32 %s1045, 4
          %s1074 = int_to_ptr.vmem [resolvable:$true] %s1073
          %1079 = dma.vmem_to_hbm [thread:$0]  %s1074, 512, %s1072, %s1042, 128, 128, 8
        $region68: #{tpu_custom_call.1} parent=35 // pred_fallthru
          _
      $region36: #{tpu_custom_call.1} parent=5 // pred_fallthru
        _
      %p1080 = scmp.le.s32.totalorder 2, %s26
      // Predicated region
      $region69: #{tpu_custom_call.1} parent=5 // pred_check
        %p1081 = pneg %p1080
      $region70: #{tpu_custom_call.1} parent=5 // pred_check_branch
        %1083 = sbr.rel (%p1081) target = $region72
      $region71: #{tpu_custom_call.1} parent=5 // pred_region
        %s1084 = ssub.s32 %s26, 2
        // Predicated region
        $region73: #{tpu_custom_call.1} parent=71 // pred_check
          %p1085 = pneg %p167
        $region74: #{tpu_custom_call.1} parent=71 // pred_check_branch
          %1087 = sbr.rel (%p1085) target = $region76
        $region75: #{tpu_custom_call.1} parent=71 // pred_region
          %s1088 = sand.u32 %s152, 1
          %s1089 = scalar_lea.sflag [#allocation4], %s1088
          %s1090 = sand.u32 %s152, 1
          %s1091 = smul.addr %s1090, 32
          %s1092 = scalar_lea.vmem [#allocation11], %s1091
          %1093 = dma.done %s1089, 512
        $region76: #{tpu_custom_call.1} parent=71 // pred_fallthru
          _
        // Predicated region
        $region77: #{tpu_custom_call.1} parent=71 // pred_check
          %p1094 = pneg %p195
        $region78: #{tpu_custom_call.1} parent=71 // pred_check_branch
          %1096 = sbr.rel (%p1094) target = $region80
        $region79: #{tpu_custom_call.1} parent=71 // pred_region
          %s1097 = sand.u32 %s180, 1
          %s1098 = scalar_lea.sflag [#allocation13], %s1097
          %s1099 = sand.u32 %s180, 1
          %s1100 = smul.addr %s1099, 32
          %s1101 = scalar_lea.vmem [#allocation12], %s1100
          %1102 = dma.done %s1098, 512
        $region80: #{tpu_custom_call.1} parent=71 // pred_fallthru
          _
      $region72: #{tpu_custom_call.1} parent=5 // pred_fallthru
        _
    $region6: #{tpu_custom_call.1} parent=1 // loop_footer
      %s30 = sadd.s32 1, %s26
    $region7: #{tpu_custom_call.1} parent=1 // loop_footer_branch
      %25 = sbr.rel target = $region3
    $region8: #{tpu_custom_call.1} parent=1 // loop_exit
      _
    %1103 = vsyncpa [#allocation3], 1
    %s1104 = scalar_lea.sflag [#allocation3], 1
    %1105 = vsyncpa %s1104, 1
    %1106 = vsyncpa [#allocation10], 1
    %s1107 = scalar_lea.sflag [#allocation10], 1
    %1108 = vsyncpa %s1107, 1
    %1109 = vsyncpa [#allocation4], 1
    %s1110 = scalar_lea.sflag [#allocation4], 1
    %1111 = vsyncpa %s1110, 1
    %1112 = vsyncpa [#allocation13], 1
    %s1113 = scalar_lea.sflag [#allocation13], 1
    %1114 = vsyncpa %s1113, 1
    %1115 = vsyncpa [#allocation5], 1
    %s1116 = scalar_lea.sflag [#allocation5], 1
    %1117 = vsyncpa %s1116, 1
    %1118 = vsyncpa [#allocation6], 1
    %s1119 = scalar_lea.sflag [#allocation6], 1
    %1120 = vsyncpa %s1119, 1

</llo_original>
